<compile_context>
chip_gen: v7x
topology: tpu7x:2x2x1
jax: 0.10.0
libtpu: 0.0.40
codegen_flags: <defaults>
</compile_context>

<pallas_src>
import functools

import jax
import jax.numpy as jnp
from jax import lax
from jax.experimental import pallas as pl
from jax.experimental.pallas import tpu as pltpu

BN_EPS = 1e-5
P_KEYS = ("wq", "bq", "wk", "bk", "wv", "bv", "we", "ws", "bs",
          "gamma", "beta", "mean", "var")


# ------------------------- pure-JAX reference (unpacked params) -------------------------- #

def _transformer_conv_ref(x, adj, ea, wq, bq, wk, bk, wv, bv, we, ws, bs, *, heads, C):
    q = jnp.dot(x, wq, preferred_element_type=jnp.float32) + bq
    k = jnp.dot(x, wk, preferred_element_type=jnp.float32) + bk
    v = jnp.dot(x, wv, preferred_element_type=jnp.float32) + bv
    scale = 1.0 / jnp.sqrt(jnp.float32(C))
    neg = jnp.float32(-1e30)
    mask = adj > 0

    head_outs = []
    for h in range(heads):
        sl = slice(h * C, (h + 1) * C)
        qh, kh, vh, weh = q[:, sl], k[:, sl], v[:, sl], we[:, sl]
        qk = jnp.dot(qh, kh.T, preferred_element_type=jnp.float32)
        qe = jnp.sum(qh * weh, axis=-1, keepdims=True)
        logits = jnp.where(mask, (qk + qe * ea) * scale, neg)
        m = jnp.max(logits, axis=-1, keepdims=True)
        p = jnp.exp(logits - m) * adj
        denom = jnp.sum(p, axis=-1, keepdims=True)
        alpha = p / jnp.maximum(denom, jnp.float32(1e-30))
        s = jnp.sum(alpha * ea, axis=-1, keepdims=True)
        head_outs.append(jnp.dot(alpha, vh, preferred_element_type=jnp.float32) + s * weh)

    out = head_outs[0] if heads == 1 else jnp.concatenate(head_outs, axis=-1)
    return out + jnp.dot(x, ws, preferred_element_type=jnp.float32) + bs


def _bn_eval_ref(x, gamma, beta, mean, var, eps=BN_EPS):
    return (x - mean) * (gamma * lax.rsqrt(var + eps)) + beta


def gtc_reference(x, adj, ea, p1, p2, lw, lb, *, heads, c1, c2):
    h = _transformer_conv_ref(x, adj, ea, *(p1[k] for k in P_KEYS[:9]), heads=heads, C=c1)
    h = jnp.maximum(h, 0.0)
    h = _bn_eval_ref(h, p1["gamma"], p1["beta"], p1["mean"], p1["var"])
    h = _transformer_conv_ref(h, adj, ea, *(p2[k] for k in P_KEYS[:9]), heads=1, C=c2)
    h = jnp.maximum(h, 0.0)
    h = _bn_eval_ref(h, p2["gamma"], p2["beta"], p2["mean"], p2["var"])
    return jnp.dot(h, lw, preferred_element_type=jnp.float32) + lb


# --------------------------------- parameter packing ------------------------------------- #

def pack_tconv_params(p, eps=BN_EPS):
    """Pack TransformerConv + (eval) BatchNorm params into 3 kernel operands.

    w   : (in_dim, 4*hc)  = [Wq | Wk | Wv | Wskip]        -> single fused MXU projection
    b   : (1, 4*hc)       = [bq | bk | bv | bskip]
    aux : (3, hc)         = [we ; bn_scale ; bn_shift]     (BN folded to scale/shift)
    """
    w = jnp.concatenate([p["wq"], p["wk"], p["wv"], p["ws"]], axis=1)
    b = jnp.concatenate([p["bq"], p["bk"], p["bv"], p["bs"]], axis=1)
    bn_scale = p["gamma"] * lax.rsqrt(p["var"] + eps)
    bn_shift = p["beta"] - p["mean"] * bn_scale
    aux = jnp.concatenate([p["we"], bn_scale, bn_shift], axis=0)
    return w, b, aux


# ------------------------------------ Pallas kernel -------------------------------------- #

def _fused_tconv_relu_bn(x, adj, ea, w, b, aux, *, heads, C):
    """TransformerConv (dense adjacency, edge_dim=1) + ReLU + folded BN, in VMEM."""
    hc = heads * C
    # single fused projection for q, k, v and the root/skip path  (one MXU matmul)
    proj = jnp.dot(x, w, preferred_element_type=jnp.float32) + b       # (N, 4*hc)
    q = proj[:, 0:hc]
    k = proj[:, hc:2 * hc]
    v = proj[:, 2 * hc:3 * hc]
    skip = proj[:, 3 * hc:4 * hc]
    we = aux[0:1, :]                                                   # (1, hc)
    bn_scale = aux[1:2, :]
    bn_shift = aux[2:3, :]

    inv_sqrt_c = 1.0 / jnp.sqrt(jnp.float32(C))
    neg = jnp.float32(-1e30)
    mask = adj > 0

    head_outs = []
    for h in range(heads):                       # static & tiny; each iteration is MXU work
        sl = slice(h * C, (h + 1) * C)
        qh, kh, vh, weh = q[:, sl], k[:, sl], v[:, sl], we[:, sl]

        # logits[i, j] = q_i . (k_j + ea_ij * we) / sqrt(C)   (edge term is rank-1)
        qk = jnp.dot(qh, kh.T, preferred_element_type=jnp.float32)      # (N, N)   MXU
        qe = jnp.sum(qh * weh, axis=-1, keepdims=True)                   # (N, 1)
        logits = jnp.where(mask, (qk + qe * ea) * inv_sqrt_c, neg)

        # masked softmax over incoming edges j (rows without edges -> all-zero alpha)
        m = jnp.max(logits, axis=-1, keepdims=True)
        p = jnp.exp(logits - m) * adj
        denom = jnp.sum(p, axis=-1, keepdims=True)
        alpha = p / jnp.maximum(denom, jnp.float32(1e-30))               # (N, N)

        # out_i = sum_j alpha_ij * (v_j + ea_ij * we)
        s = jnp.sum(alpha * ea, axis=-1, keepdims=True)                  # (N, 1)
        head_outs.append(jnp.dot(alpha, vh, preferred_element_type=jnp.float32)
                         + s * weh)                                      # (N, C)

    out = head_outs[0] if heads == 1 else jnp.concatenate(head_outs, axis=-1)
    out = out + skip                              # root / skip connection
    out = jnp.maximum(out, 0.0)                   # ReLU
    return out * bn_scale + bn_shift              # BatchNorm (eval) folded to scale/shift


def gtc_kernel(x_ref, adj_ref, ea_ref, w1_ref, b1_ref, aux1_ref,
               w2_ref, b2_ref, aux2_ref, lw_ref, lb_ref, o_ref, *, heads, c1, c2):
    x, adj, ea = x_ref[...], adj_ref[...], ea_ref[...]
    # layer 1: TransformerConv(heads, concat) + ReLU + BN1  (dropout = identity in eval)
    h = _fused_tconv_relu_bn(x, adj, ea, w1_ref[...], b1_ref[...], aux1_ref[...],
                             heads=heads, C=c1)
    # layer 2: TransformerConv(heads=1) + ReLU + BN2  (dropout = identity in eval)
    h = _fused_tconv_relu_bn(h, adj, ea, w2_ref[...], b2_ref[...], aux2_ref[...],
                             heads=1, C=c2)
    # final Linear
    o_ref[...] = jnp.dot(h, lw_ref[...], preferred_element_type=jnp.float32) + lb_ref[...]


@functools.partial(jax.jit, static_argnames=("heads", "c1", "c2"))
def gtc_forward(x, adj, ea, w1, b1, aux1, w2, b2, aux2, lw, lb, *, heads, c1, c2):
    N = x.shape[0]
    out_f = lw.shape[1]
    args = (x, adj, ea, w1, b1, aux1, w2, b2, aux2, lw, lb)
    kernel = functools.partial(gtc_kernel, heads=heads, c1=c1, c2=c2)
    return pl.pallas_call(
        kernel,
        out_shape=jax.ShapeDtypeStruct((N, out_f), jnp.float32),
        in_specs=[pl.BlockSpec(memory_space=pltpu.MemorySpace.VMEM) for _ in args],
        out_specs=pl.BlockSpec(memory_space=pltpu.MemorySpace.VMEM),
    )(*args)


# --------------------------------- parameter / input setup ------------------------------- #

def init_tconv_params(key, in_dim, heads, C):
    hc = heads * C
    ks = jax.random.split(key, 13)
    s_in = 1.0 / jnp.sqrt(jnp.float32(in_dim))

    def lin(k, shape, scale):
        return scale * jax.random.normal(k, shape, jnp.float32)

    return dict(
        wq=lin(ks[0], (in_dim, hc), s_in), bq=lin(ks[1], (1, hc), 0.02),
        wk=lin(ks[2], (in_dim, hc), s_in), bk=lin(ks[3], (1, hc), 0.02),
        wv=lin(ks[4], (in_dim, hc), s_in), bv=lin(ks[5], (1, hc), 0.02),
        we=lin(ks[6], (1, hc), 1.0),                       # lin_edge (edge_dim=1, no bias)
        ws=lin(ks[7], (in_dim, hc), s_in), bs=lin(ks[8], (1, hc), 0.02),   # lin_skip
        gamma=1.0 + 0.05 * jax.random.normal(ks[9], (1, hc), jnp.float32),
        beta=0.05 * jax.random.normal(ks[10], (1, hc), jnp.float32),
        mean=0.05 * jax.random.normal(ks[11], (1, hc), jnp.float32),
        var=1.0 + 0.1 * jax.random.uniform(ks[12], (1, hc), jnp.float32),
    )


# ------------------------------------------ main ----------------------------------------- #

if __name__ == "__main__":
    N, in_f, CL1_F, CL2_F, heads, out_f = 16, 16, 8, 8, 4, 4
    p_dropout = 0.5  # identity in eval mode

    key = jax.random.PRNGKey(0)
    kx, ke, k1, k2, kl = jax.random.split(key, 5)

    # node features
    x = jax.random.normal(kx, (N, in_f), jnp.float32)

    # ring graph (both directions) with a scalar edge attribute per edge
    src = jnp.arange(N, dtype=jnp.int32)
    dst = (src + 1) % N
    edge_index = jnp.stack([jnp.concatenate([src, dst]),      # row 0 = source j
                            jnp.concatenate([dst, src])])     # row 1 = target i
    E = edge_index.shape[1]
    edge_attr = jax.random.normal(ke, (E, 1), jnp.float32)

    # densify: adj[i, j] = 1 and ea[i, j] = attr for each edge j -> i (no self loops)
    adj = jnp.zeros((N, N), jnp.float32).at[edge_index[1], edge_index[0]].set(1.0)
    ea = jnp.zeros((N, N), jnp.float32).at[edge_index[1], edge_index[0]].set(edge_attr[:, 0])

    # deterministic parameters
    p1 = init_tconv_params(k1, in_f, heads, CL1_F)
    p2 = init_tconv_params(k2, CL1_F * heads, 1, CL2_F)
    kw, kb = jax.random.split(kl)
    lw = jax.random.normal(kw, (CL2_F, out_f), jnp.float32) / jnp.sqrt(jnp.float32(CL2_F))
    lb = 0.02 * jax.random.normal(kb, (1, out_f), jnp.float32)

    # pack parameters once (outside the hot path): fused QKVS weights + folded BN
    w1, b1, aux1 = pack_tconv_params(p1)
    w2, b2, aux2 = pack_tconv_params(p2)

    out = gtc_forward(x, adj, ea, w1, b1, aux1, w2, b2, aux2, lw, lb,
                      heads=heads, c1=CL1_F, c2=CL2_F)
    out = jax.block_until_ready(out)

    # pure-JAX reference with the original (unpacked, unfolded) parameters
    ref = gtc_reference(x, adj, ea, p1, p2, lw, lb, heads=heads, c1=CL1_F, c2=CL2_F)

    assert out.shape == (N, out_f), out.shape
    assert bool(jnp.all(jnp.isfinite(out)))
    assert bool(jnp.allclose(out, ref, rtol=1e-3, atol=1e-3)), \
        float(jnp.max(jnp.abs(out - ref)))
    print("KERNEL_OK")
</pallas_src>

<mosaic_0001>
module attributes {stable_mosaic.version = 11 : i64} {
  func.func @gtc_kernel(%arg0: memref<16x16xf32, #tpu.memory_space<vmem>>, %arg1: memref<16x16xf32, #tpu.memory_space<vmem>>, %arg2: memref<16x16xf32, #tpu.memory_space<vmem>>, %arg3: memref<16x128xf32, #tpu.memory_space<vmem>>, %arg4: memref<1x128xf32, #tpu.memory_space<vmem>>, %arg5: memref<3x32xf32, #tpu.memory_space<vmem>>, %arg6: memref<32x32xf32, #tpu.memory_space<vmem>>, %arg7: memref<1x32xf32, #tpu.memory_space<vmem>>, %arg8: memref<3x8xf32, #tpu.memory_space<vmem>>, %arg9: memref<8x4xf32, #tpu.memory_space<vmem>>, %arg10: memref<1x4xf32, #tpu.memory_space<vmem>>, %arg11: memref<16x4xf32, #tpu.memory_space<vmem>>) attributes {dimension_semantics = [], scalar_prefetch = 0 : i64, scratch_operands = 0 : i64, tpu.core_type = #tpu.core_type<tc>} {
    %c0 = arith.constant 0 : index
    %c0_0 = arith.constant 0 : index
    %0 = vector.load %arg0[%c0, %c0_0] : memref<16x16xf32, #tpu.memory_space<vmem>>, vector<16x16xf32>
    %c0_1 = arith.constant 0 : index
    %c0_2 = arith.constant 0 : index
    %1 = vector.load %arg1[%c0_1, %c0_2] : memref<16x16xf32, #tpu.memory_space<vmem>>, vector<16x16xf32>
    %c0_3 = arith.constant 0 : index
    %c0_4 = arith.constant 0 : index
    %2 = vector.load %arg2[%c0_3, %c0_4] : memref<16x16xf32, #tpu.memory_space<vmem>>, vector<16x16xf32>
    %c0_5 = arith.constant 0 : index
    %c0_6 = arith.constant 0 : index
    %3 = vector.load %arg3[%c0_5, %c0_6] : memref<16x128xf32, #tpu.memory_space<vmem>>, vector<16x128xf32>
    %c0_7 = arith.constant 0 : index
    %c0_8 = arith.constant 0 : index
    %4 = vector.load %arg4[%c0_7, %c0_8] : memref<1x128xf32, #tpu.memory_space<vmem>>, vector<1x128xf32>
    %c0_9 = arith.constant 0 : index
    %c0_10 = arith.constant 0 : index
    %5 = vector.load %arg5[%c0_9, %c0_10] : memref<3x32xf32, #tpu.memory_space<vmem>>, vector<3x32xf32>
    %cst = arith.constant dense<0.000000e+00> : vector<16x128xf32>
    %6 = tpu.matmul %0, %3, %cst {dimension_numbers = #tpu.dot_dimension_numbers<[1], [0], [0], [1], [0, 0, 1, 1], [], []>} : vector<16x16xf32>, vector<16x128xf32>, vector<16x128xf32> -> vector<16x128xf32>
    %7 = vector.broadcast %4 : vector<1x128xf32> to vector<16x128xf32>
    %8 = arith.addf %6, %7 : vector<16x128xf32>
    %9 = vector.extract_strided_slice %8 {offsets = [0, 0], sizes = [16, 32], strides = [1, 1]} : vector<16x128xf32> to vector<16x32xf32>
    %10 = vector.extract_strided_slice %8 {offsets = [0, 32], sizes = [16, 32], strides = [1, 1]} : vector<16x128xf32> to vector<16x32xf32>
    %11 = vector.extract_strided_slice %8 {offsets = [0, 64], sizes = [16, 32], strides = [1, 1]} : vector<16x128xf32> to vector<16x32xf32>
    %12 = vector.extract_strided_slice %8 {offsets = [0, 96], sizes = [16, 32], strides = [1, 1]} : vector<16x128xf32> to vector<16x32xf32>
    %13 = vector.extract_strided_slice %5 {offsets = [0, 0], sizes = [1, 32], strides = [1, 1]} : vector<3x32xf32> to vector<1x32xf32>
    %14 = vector.extract_strided_slice %5 {offsets = [1, 0], sizes = [1, 32], strides = [1, 1]} : vector<3x32xf32> to vector<1x32xf32>
    %15 = vector.extract_strided_slice %5 {offsets = [2, 0], sizes = [1, 32], strides = [1, 1]} : vector<3x32xf32> to vector<1x32xf32>
    %cst_11 = arith.constant 8.000000e+00 : f32
    %16 = math.sqrt %cst_11 : f32
    %cst_12 = arith.constant 1.000000e+00 : f32
    %17 = arith.divf %cst_12, %16 : f32
    %cst_13 = arith.constant 0.000000e+00 : f32
    %18 = vector.broadcast %cst_13 : f32 to vector<16x16xf32>
    %19 = arith.cmpf ogt, %1, %18 : vector<16x16xf32>
    %20 = vector.extract_strided_slice %9 {offsets = [0, 0], sizes = [16, 8], strides = [1, 1]} : vector<16x32xf32> to vector<16x8xf32>
    %21 = vector.extract_strided_slice %10 {offsets = [0, 0], sizes = [16, 8], strides = [1, 1]} : vector<16x32xf32> to vector<16x8xf32>
    %22 = vector.extract_strided_slice %11 {offsets = [0, 0], sizes = [16, 8], strides = [1, 1]} : vector<16x32xf32> to vector<16x8xf32>
    %23 = vector.extract_strided_slice %13 {offsets = [0, 0], sizes = [1, 8], strides = [1, 1]} : vector<1x32xf32> to vector<1x8xf32>
    %24 = tpu.transpose %21, [1, 0] : vector<16x8xf32> -> vector<8x16xf32>
    %cst_14 = arith.constant dense<0.000000e+00> : vector<16x16xf32>
    %25 = tpu.matmul %20, %24, %cst_14 {dimension_numbers = #tpu.dot_dimension_numbers<[1], [0], [0], [1], [0, 0, 1, 1], [], []>} : vector<16x8xf32>, vector<8x16xf32>, vector<16x16xf32> -> vector<16x16xf32>
    %26 = vector.broadcast %23 : vector<1x8xf32> to vector<16x8xf32>
    %27 = arith.mulf %20, %26 : vector<16x8xf32>
    %cst_15 = arith.constant dense<0.000000e+00> : vector<16xf32>
    %28 = vector.multi_reduction <add>, %27, %cst_15 [1] : vector<16x8xf32> to vector<16xf32>
    %29 = vector.shape_cast %28 : vector<16xf32> to vector<16x1xf32>
    %30 = vector.broadcast %29 : vector<16x1xf32> to vector<16x16xf32>
    %31 = arith.mulf %30, %2 : vector<16x16xf32>
    %32 = arith.addf %25, %31 : vector<16x16xf32>
    %33 = vector.broadcast %17 : f32 to vector<16x16xf32>
    %34 = arith.mulf %32, %33 : vector<16x16xf32>
    %cst_16 = arith.constant -1.000000e+30 : f32
    %35 = vector.broadcast %cst_16 : f32 to vector<16x16xf32>
    %36 = arith.select %19, %34, %35 : vector<16x16xi1>, vector<16x16xf32>
    %cst_17 = arith.constant dense<0xFF800000> : vector<16xf32>
    %37 = vector.multi_reduction <maximumf>, %36, %cst_17 [1] : vector<16x16xf32> to vector<16xf32>
    %38 = vector.shape_cast %37 : vector<16xf32> to vector<16x1xf32>
    %39 = vector.broadcast %38 : vector<16x1xf32> to vector<16x16xf32>
    %40 = arith.subf %36, %39 : vector<16x16xf32>
    %41 = math.exp %40 : vector<16x16xf32>
    %42 = arith.mulf %41, %1 : vector<16x16xf32>
    %cst_18 = arith.constant dense<0.000000e+00> : vector<16xf32>
    %43 = vector.multi_reduction <add>, %42, %cst_18 [1] : vector<16x16xf32> to vector<16xf32>
    %44 = vector.shape_cast %43 : vector<16xf32> to vector<16x1xf32>
    %cst_19 = arith.constant 1.000000e-30 : f32
    %45 = vector.broadcast %cst_19 : f32 to vector<16x1xf32>
    %46 = arith.maximumf %44, %45 : vector<16x1xf32>
    %47 = vector.broadcast %46 : vector<16x1xf32> to vector<16x16xf32>
    %48 = arith.divf %42, %47 : vector<16x16xf32>
    %49 = arith.mulf %48, %2 : vector<16x16xf32>
    %cst_20 = arith.constant dense<0.000000e+00> : vector<16xf32>
    %50 = vector.multi_reduction <add>, %49, %cst_20 [1] : vector<16x16xf32> to vector<16xf32>
    %51 = vector.shape_cast %50 : vector<16xf32> to vector<16x1xf32>
    %cst_21 = arith.constant dense<0.000000e+00> : vector<16x8xf32>
    %52 = tpu.matmul %48, %22, %cst_21 {dimension_numbers = #tpu.dot_dimension_numbers<[1], [0], [0], [1], [0, 0, 1, 1], [], []>} : vector<16x16xf32>, vector<16x8xf32>, vector<16x8xf32> -> vector<16x8xf32>
    %53 = vector.broadcast %51 : vector<16x1xf32> to vector<16x8xf32>
    %54 = vector.broadcast %23 : vector<1x8xf32> to vector<16x8xf32>
    %55 = arith.mulf %53, %54 : vector<16x8xf32>
    %56 = arith.addf %52, %55 : vector<16x8xf32>
    %57 = vector.extract_strided_slice %9 {offsets = [0, 8], sizes = [16, 8], strides = [1, 1]} : vector<16x32xf32> to vector<16x8xf32>
    %58 = vector.extract_strided_slice %10 {offsets = [0, 8], sizes = [16, 8], strides = [1, 1]} : vector<16x32xf32> to vector<16x8xf32>
    %59 = vector.extract_strided_slice %11 {offsets = [0, 8], sizes = [16, 8], strides = [1, 1]} : vector<16x32xf32> to vector<16x8xf32>
    %60 = vector.extract_strided_slice %13 {offsets = [0, 8], sizes = [1, 8], strides = [1, 1]} : vector<1x32xf32> to vector<1x8xf32>
    %61 = tpu.transpose %58, [1, 0] : vector<16x8xf32> -> vector<8x16xf32>
    %cst_22 = arith.constant dense<0.000000e+00> : vector<16x16xf32>
    %62 = tpu.matmul %57, %61, %cst_22 {dimension_numbers = #tpu.dot_dimension_numbers<[1], [0], [0], [1], [0, 0, 1, 1], [], []>} : vector<16x8xf32>, vector<8x16xf32>, vector<16x16xf32> -> vector<16x16xf32>
    %63 = vector.broadcast %60 : vector<1x8xf32> to vector<16x8xf32>
    %64 = arith.mulf %57, %63 : vector<16x8xf32>
    %cst_23 = arith.constant dense<0.000000e+00> : vector<16xf32>
    %65 = vector.multi_reduction <add>, %64, %cst_23 [1] : vector<16x8xf32> to vector<16xf32>
    %66 = vector.shape_cast %65 : vector<16xf32> to vector<16x1xf32>
    %67 = vector.broadcast %66 : vector<16x1xf32> to vector<16x16xf32>
    %68 = arith.mulf %67, %2 : vector<16x16xf32>
    %69 = arith.addf %62, %68 : vector<16x16xf32>
    %70 = vector.broadcast %17 : f32 to vector<16x16xf32>
    %71 = arith.mulf %69, %70 : vector<16x16xf32>
    %cst_24 = arith.constant -1.000000e+30 : f32
    %72 = vector.broadcast %cst_24 : f32 to vector<16x16xf32>
    %73 = arith.select %19, %71, %72 : vector<16x16xi1>, vector<16x16xf32>
    %cst_25 = arith.constant dense<0xFF800000> : vector<16xf32>
    %74 = vector.multi_reduction <maximumf>, %73, %cst_25 [1] : vector<16x16xf32> to vector<16xf32>
    %75 = vector.shape_cast %74 : vector<16xf32> to vector<16x1xf32>
    %76 = vector.broadcast %75 : vector<16x1xf32> to vector<16x16xf32>
    %77 = arith.subf %73, %76 : vector<16x16xf32>
    %78 = math.exp %77 : vector<16x16xf32>
    %79 = arith.mulf %78, %1 : vector<16x16xf32>
    %cst_26 = arith.constant dense<0.000000e+00> : vector<16xf32>
    %80 = vector.multi_reduction <add>, %79, %cst_26 [1] : vector<16x16xf32> to vector<16xf32>
    %81 = vector.shape_cast %80 : vector<16xf32> to vector<16x1xf32>
    %cst_27 = arith.constant 1.000000e-30 : f32
    %82 = vector.broadcast %cst_27 : f32 to vector<16x1xf32>
    %83 = arith.maximumf %81, %82 : vector<16x1xf32>
    %84 = vector.broadcast %83 : vector<16x1xf32> to vector<16x16xf32>
    %85 = arith.divf %79, %84 : vector<16x16xf32>
    %86 = arith.mulf %85, %2 : vector<16x16xf32>
    %cst_28 = arith.constant dense<0.000000e+00> : vector<16xf32>
    %87 = vector.multi_reduction <add>, %86, %cst_28 [1] : vector<16x16xf32> to vector<16xf32>
    %88 = vector.shape_cast %87 : vector<16xf32> to vector<16x1xf32>
    %cst_29 = arith.constant dense<0.000000e+00> : vector<16x8xf32>
    %89 = tpu.matmul %85, %59, %cst_29 {dimension_numbers = #tpu.dot_dimension_numbers<[1], [0], [0], [1], [0, 0, 1, 1], [], []>} : vector<16x16xf32>, vector<16x8xf32>, vector<16x8xf32> -> vector<16x8xf32>
    %90 = vector.broadcast %88 : vector<16x1xf32> to vector<16x8xf32>
    %91 = vector.broadcast %60 : vector<1x8xf32> to vector<16x8xf32>
    %92 = arith.mulf %90, %91 : vector<16x8xf32>
    %93 = arith.addf %89, %92 : vector<16x8xf32>
    %94 = vector.extract_strided_slice %9 {offsets = [0, 16], sizes = [16, 8], strides = [1, 1]} : vector<16x32xf32> to vector<16x8xf32>
    %95 = vector.extract_strided_slice %10 {offsets = [0, 16], sizes = [16, 8], strides = [1, 1]} : vector<16x32xf32> to vector<16x8xf32>
    %96 = vector.extract_strided_slice %11 {offsets = [0, 16], sizes = [16, 8], strides = [1, 1]} : vector<16x32xf32> to vector<16x8xf32>
    %97 = vector.extract_strided_slice %13 {offsets = [0, 16], sizes = [1, 8], strides = [1, 1]} : vector<1x32xf32> to vector<1x8xf32>
    %98 = tpu.transpose %95, [1, 0] : vector<16x8xf32> -> vector<8x16xf32>
    %cst_30 = arith.constant dense<0.000000e+00> : vector<16x16xf32>
    %99 = tpu.matmul %94, %98, %cst_30 {dimension_numbers = #tpu.dot_dimension_numbers<[1], [0], [0], [1], [0, 0, 1, 1], [], []>} : vector<16x8xf32>, vector<8x16xf32>, vector<16x16xf32> -> vector<16x16xf32>
    %100 = vector.broadcast %97 : vector<1x8xf32> to vector<16x8xf32>
    %101 = arith.mulf %94, %100 : vector<16x8xf32>
    %cst_31 = arith.constant dense<0.000000e+00> : vector<16xf32>
    %102 = vector.multi_reduction <add>, %101, %cst_31 [1] : vector<16x8xf32> to vector<16xf32>
    %103 = vector.shape_cast %102 : vector<16xf32> to vector<16x1xf32>
    %104 = vector.broadcast %103 : vector<16x1xf32> to vector<16x16xf32>
    %105 = arith.mulf %104, %2 : vector<16x16xf32>
    %106 = arith.addf %99, %105 : vector<16x16xf32>
    %107 = vector.broadcast %17 : f32 to vector<16x16xf32>
    %108 = arith.mulf %106, %107 : vector<16x16xf32>
    %cst_32 = arith.constant -1.000000e+30 : f32
    %109 = vector.broadcast %cst_32 : f32 to vector<16x16xf32>
    %110 = arith.select %19, %108, %109 : vector<16x16xi1>, vector<16x16xf32>
    %cst_33 = arith.constant dense<0xFF800000> : vector<16xf32>
    %111 = vector.multi_reduction <maximumf>, %110, %cst_33 [1] : vector<16x16xf32> to vector<16xf32>
    %112 = vector.shape_cast %111 : vector<16xf32> to vector<16x1xf32>
    %113 = vector.broadcast %112 : vector<16x1xf32> to vector<16x16xf32>
    %114 = arith.subf %110, %113 : vector<16x16xf32>
    %115 = math.exp %114 : vector<16x16xf32>
    %116 = arith.mulf %115, %1 : vector<16x16xf32>
    %cst_34 = arith.constant dense<0.000000e+00> : vector<16xf32>
    %117 = vector.multi_reduction <add>, %116, %cst_34 [1] : vector<16x16xf32> to vector<16xf32>
    %118 = vector.shape_cast %117 : vector<16xf32> to vector<16x1xf32>
    %cst_35 = arith.constant 1.000000e-30 : f32
    %119 = vector.broadcast %cst_35 : f32 to vector<16x1xf32>
    %120 = arith.maximumf %118, %119 : vector<16x1xf32>
    %121 = vector.broadcast %120 : vector<16x1xf32> to vector<16x16xf32>
    %122 = arith.divf %116, %121 : vector<16x16xf32>
    %123 = arith.mulf %122, %2 : vector<16x16xf32>
    %cst_36 = arith.constant dense<0.000000e+00> : vector<16xf32>
    %124 = vector.multi_reduction <add>, %123, %cst_36 [1] : vector<16x16xf32> to vector<16xf32>
    %125 = vector.shape_cast %124 : vector<16xf32> to vector<16x1xf32>
    %cst_37 = arith.constant dense<0.000000e+00> : vector<16x8xf32>
    %126 = tpu.matmul %122, %96, %cst_37 {dimension_numbers = #tpu.dot_dimension_numbers<[1], [0], [0], [1], [0, 0, 1, 1], [], []>} : vector<16x16xf32>, vector<16x8xf32>, vector<16x8xf32> -> vector<16x8xf32>
    %127 = vector.broadcast %125 : vector<16x1xf32> to vector<16x8xf32>
    %128 = vector.broadcast %97 : vector<1x8xf32> to vector<16x8xf32>
    %129 = arith.mulf %127, %128 : vector<16x8xf32>
    %130 = arith.addf %126, %129 : vector<16x8xf32>
    %131 = vector.extract_strided_slice %9 {offsets = [0, 24], sizes = [16, 8], strides = [1, 1]} : vector<16x32xf32> to vector<16x8xf32>
    %132 = vector.extract_strided_slice %10 {offsets = [0, 24], sizes = [16, 8], strides = [1, 1]} : vector<16x32xf32> to vector<16x8xf32>
    %133 = vector.extract_strided_slice %11 {offsets = [0, 24], sizes = [16, 8], strides = [1, 1]} : vector<16x32xf32> to vector<16x8xf32>
    %134 = vector.extract_strided_slice %13 {offsets = [0, 24], sizes = [1, 8], strides = [1, 1]} : vector<1x32xf32> to vector<1x8xf32>
    %135 = tpu.transpose %132, [1, 0] : vector<16x8xf32> -> vector<8x16xf32>
    %cst_38 = arith.constant dense<0.000000e+00> : vector<16x16xf32>
    %136 = tpu.matmul %131, %135, %cst_38 {dimension_numbers = #tpu.dot_dimension_numbers<[1], [0], [0], [1], [0, 0, 1, 1], [], []>} : vector<16x8xf32>, vector<8x16xf32>, vector<16x16xf32> -> vector<16x16xf32>
    %137 = vector.broadcast %134 : vector<1x8xf32> to vector<16x8xf32>
    %138 = arith.mulf %131, %137 : vector<16x8xf32>
    %cst_39 = arith.constant dense<0.000000e+00> : vector<16xf32>
    %139 = vector.multi_reduction <add>, %138, %cst_39 [1] : vector<16x8xf32> to vector<16xf32>
    %140 = vector.shape_cast %139 : vector<16xf32> to vector<16x1xf32>
    %141 = vector.broadcast %140 : vector<16x1xf32> to vector<16x16xf32>
    %142 = arith.mulf %141, %2 : vector<16x16xf32>
    %143 = arith.addf %136, %142 : vector<16x16xf32>
    %144 = vector.broadcast %17 : f32 to vector<16x16xf32>
    %145 = arith.mulf %143, %144 : vector<16x16xf32>
    %cst_40 = arith.constant -1.000000e+30 : f32
    %146 = vector.broadcast %cst_40 : f32 to vector<16x16xf32>
    %147 = arith.select %19, %145, %146 : vector<16x16xi1>, vector<16x16xf32>
    %cst_41 = arith.constant dense<0xFF800000> : vector<16xf32>
    %148 = vector.multi_reduction <maximumf>, %147, %cst_41 [1] : vector<16x16xf32> to vector<16xf32>
    %149 = vector.shape_cast %148 : vector<16xf32> to vector<16x1xf32>
    %150 = vector.broadcast %149 : vector<16x1xf32> to vector<16x16xf32>
    %151 = arith.subf %147, %150 : vector<16x16xf32>
    %152 = math.exp %151 : vector<16x16xf32>
    %153 = arith.mulf %152, %1 : vector<16x16xf32>
    %cst_42 = arith.constant dense<0.000000e+00> : vector<16xf32>
    %154 = vector.multi_reduction <add>, %153, %cst_42 [1] : vector<16x16xf32> to vector<16xf32>
    %155 = vector.shape_cast %154 : vector<16xf32> to vector<16x1xf32>
    %cst_43 = arith.constant 1.000000e-30 : f32
    %156 = vector.broadcast %cst_43 : f32 to vector<16x1xf32>
    %157 = arith.maximumf %155, %156 : vector<16x1xf32>
    %158 = vector.broadcast %157 : vector<16x1xf32> to vector<16x16xf32>
    %159 = arith.divf %153, %158 : vector<16x16xf32>
    %160 = arith.mulf %159, %2 : vector<16x16xf32>
    %cst_44 = arith.constant dense<0.000000e+00> : vector<16xf32>
    %161 = vector.multi_reduction <add>, %160, %cst_44 [1] : vector<16x16xf32> to vector<16xf32>
    %162 = vector.shape_cast %161 : vector<16xf32> to vector<16x1xf32>
    %cst_45 = arith.constant dense<0.000000e+00> : vector<16x8xf32>
    %163 = tpu.matmul %159, %133, %cst_45 {dimension_numbers = #tpu.dot_dimension_numbers<[1], [0], [0], [1], [0, 0, 1, 1], [], []>} : vector<16x16xf32>, vector<16x8xf32>, vector<16x8xf32> -> vector<16x8xf32>
    %164 = vector.broadcast %162 : vector<16x1xf32> to vector<16x8xf32>
    %165 = vector.broadcast %134 : vector<1x8xf32> to vector<16x8xf32>
    %166 = arith.mulf %164, %165 : vector<16x8xf32>
    %167 = arith.addf %163, %166 : vector<16x8xf32>
    %168 = tpu.concatenate %56, %93, %130, %167 in 1 : vector<16x8xf32>, vector<16x8xf32>, vector<16x8xf32>, vector<16x8xf32> -> vector<16x32xf32>
    %169 = arith.addf %168, %12 : vector<16x32xf32>
    %cst_46 = arith.constant 0.000000e+00 : f32
    %170 = vector.broadcast %cst_46 : f32 to vector<16x32xf32>
    %171 = arith.maximumf %169, %170 : vector<16x32xf32>
    %172 = vector.broadcast %14 : vector<1x32xf32> to vector<16x32xf32>
    %173 = arith.mulf %171, %172 : vector<16x32xf32>
    %174 = vector.broadcast %15 : vector<1x32xf32> to vector<16x32xf32>
    %175 = arith.addf %173, %174 : vector<16x32xf32>
    %c0_47 = arith.constant 0 : index
    %c0_48 = arith.constant 0 : index
    %176 = vector.load %arg6[%c0_47, %c0_48] : memref<32x32xf32, #tpu.memory_space<vmem>>, vector<32x32xf32>
    %c0_49 = arith.constant 0 : index
    %c0_50 = arith.constant 0 : index
    %177 = vector.load %arg7[%c0_49, %c0_50] : memref<1x32xf32, #tpu.memory_space<vmem>>, vector<1x32xf32>
    %c0_51 = arith.constant 0 : index
    %c0_52 = arith.constant 0 : index
    %178 = vector.load %arg8[%c0_51, %c0_52] : memref<3x8xf32, #tpu.memory_space<vmem>>, vector<3x8xf32>
    %cst_53 = arith.constant dense<0.000000e+00> : vector<16x32xf32>
    %179 = tpu.matmul %175, %176, %cst_53 {dimension_numbers = #tpu.dot_dimension_numbers<[1], [0], [0], [1], [0, 0, 1, 1], [], []>} : vector<16x32xf32>, vector<32x32xf32>, vector<16x32xf32> -> vector<16x32xf32>
    %180 = vector.broadcast %177 : vector<1x32xf32> to vector<16x32xf32>
    %181 = arith.addf %179, %180 : vector<16x32xf32>
    %182 = vector.extract_strided_slice %181 {offsets = [0, 0], sizes = [16, 8], strides = [1, 1]} : vector<16x32xf32> to vector<16x8xf32>
    %183 = vector.extract_strided_slice %181 {offsets = [0, 8], sizes = [16, 8], strides = [1, 1]} : vector<16x32xf32> to vector<16x8xf32>
    %184 = vector.extract_strided_slice %181 {offsets = [0, 16], sizes = [16, 8], strides = [1, 1]} : vector<16x32xf32> to vector<16x8xf32>
    %185 = vector.extract_strided_slice %181 {offsets = [0, 24], sizes = [16, 8], strides = [1, 1]} : vector<16x32xf32> to vector<16x8xf32>
    %186 = vector.extract_strided_slice %178 {offsets = [0, 0], sizes = [1, 8], strides = [1, 1]} : vector<3x8xf32> to vector<1x8xf32>
    %187 = vector.extract_strided_slice %178 {offsets = [1, 0], sizes = [1, 8], strides = [1, 1]} : vector<3x8xf32> to vector<1x8xf32>
    %188 = vector.extract_strided_slice %178 {offsets = [2, 0], sizes = [1, 8], strides = [1, 1]} : vector<3x8xf32> to vector<1x8xf32>
    %cst_54 = arith.constant 8.000000e+00 : f32
    %189 = math.sqrt %cst_54 : f32
    %cst_55 = arith.constant 1.000000e+00 : f32
    %190 = arith.divf %cst_55, %189 : f32
    %cst_56 = arith.constant 0.000000e+00 : f32
    %191 = vector.broadcast %cst_56 : f32 to vector<16x16xf32>
    %192 = arith.cmpf ogt, %1, %191 : vector<16x16xf32>
    %193 = tpu.transpose %183, [1, 0] : vector<16x8xf32> -> vector<8x16xf32>
    %cst_57 = arith.constant dense<0.000000e+00> : vector<16x16xf32>
    %194 = tpu.matmul %182, %193, %cst_57 {dimension_numbers = #tpu.dot_dimension_numbers<[1], [0], [0], [1], [0, 0, 1, 1], [], []>} : vector<16x8xf32>, vector<8x16xf32>, vector<16x16xf32> -> vector<16x16xf32>
    %195 = vector.broadcast %186 : vector<1x8xf32> to vector<16x8xf32>
    %196 = arith.mulf %182, %195 : vector<16x8xf32>
    %cst_58 = arith.constant dense<0.000000e+00> : vector<16xf32>
    %197 = vector.multi_reduction <add>, %196, %cst_58 [1] : vector<16x8xf32> to vector<16xf32>
    %198 = vector.shape_cast %197 : vector<16xf32> to vector<16x1xf32>
    %199 = vector.broadcast %198 : vector<16x1xf32> to vector<16x16xf32>
    %200 = arith.mulf %199, %2 : vector<16x16xf32>
    %201 = arith.addf %194, %200 : vector<16x16xf32>
    %202 = vector.broadcast %190 : f32 to vector<16x16xf32>
    %203 = arith.mulf %201, %202 : vector<16x16xf32>
    %cst_59 = arith.constant -1.000000e+30 : f32
    %204 = vector.broadcast %cst_59 : f32 to vector<16x16xf32>
    %205 = arith.select %192, %203, %204 : vector<16x16xi1>, vector<16x16xf32>
    %cst_60 = arith.constant dense<0xFF800000> : vector<16xf32>
    %206 = vector.multi_reduction <maximumf>, %205, %cst_60 [1] : vector<16x16xf32> to vector<16xf32>
    %207 = vector.shape_cast %206 : vector<16xf32> to vector<16x1xf32>
    %208 = vector.broadcast %207 : vector<16x1xf32> to vector<16x16xf32>
    %209 = arith.subf %205, %208 : vector<16x16xf32>
    %210 = math.exp %209 : vector<16x16xf32>
    %211 = arith.mulf %210, %1 : vector<16x16xf32>
    %cst_61 = arith.constant dense<0.000000e+00> : vector<16xf32>
    %212 = vector.multi_reduction <add>, %211, %cst_61 [1] : vector<16x16xf32> to vector<16xf32>
    %213 = vector.shape_cast %212 : vector<16xf32> to vector<16x1xf32>
    %cst_62 = arith.constant 1.000000e-30 : f32
    %214 = vector.broadcast %cst_62 : f32 to vector<16x1xf32>
    %215 = arith.maximumf %213, %214 : vector<16x1xf32>
    %216 = vector.broadcast %215 : vector<16x1xf32> to vector<16x16xf32>
    %217 = arith.divf %211, %216 : vector<16x16xf32>
    %218 = arith.mulf %217, %2 : vector<16x16xf32>
    %cst_63 = arith.constant dense<0.000000e+00> : vector<16xf32>
    %219 = vector.multi_reduction <add>, %218, %cst_63 [1] : vector<16x16xf32> to vector<16xf32>
    %220 = vector.shape_cast %219 : vector<16xf32> to vector<16x1xf32>
    %cst_64 = arith.constant dense<0.000000e+00> : vector<16x8xf32>
    %221 = tpu.matmul %217, %184, %cst_64 {dimension_numbers = #tpu.dot_dimension_numbers<[1], [0], [0], [1], [0, 0, 1, 1], [], []>} : vector<16x16xf32>, vector<16x8xf32>, vector<16x8xf32> -> vector<16x8xf32>
    %222 = vector.broadcast %220 : vector<16x1xf32> to vector<16x8xf32>
    %223 = vector.broadcast %186 : vector<1x8xf32> to vector<16x8xf32>
    %224 = arith.mulf %222, %223 : vector<16x8xf32>
    %225 = arith.addf %221, %224 : vector<16x8xf32>
    %226 = arith.addf %225, %185 : vector<16x8xf32>
    %cst_65 = arith.constant 0.000000e+00 : f32
    %227 = vector.broadcast %cst_65 : f32 to vector<16x8xf32>
    %228 = arith.maximumf %226, %227 : vector<16x8xf32>
    %229 = vector.broadcast %187 : vector<1x8xf32> to vector<16x8xf32>
    %230 = arith.mulf %228, %229 : vector<16x8xf32>
    %231 = vector.broadcast %188 : vector<1x8xf32> to vector<16x8xf32>
    %232 = arith.addf %230, %231 : vector<16x8xf32>
    %c0_66 = arith.constant 0 : index
    %c0_67 = arith.constant 0 : index
    %233 = vector.load %arg9[%c0_66, %c0_67] : memref<8x4xf32, #tpu.memory_space<vmem>>, vector<8x4xf32>
    %cst_68 = arith.constant dense<0.000000e+00> : vector<16x4xf32>
    %234 = tpu.matmul %232, %233, %cst_68 {dimension_numbers = #tpu.dot_dimension_numbers<[1], [0], [0], [1], [0, 0, 1, 1], [], []>} : vector<16x8xf32>, vector<8x4xf32>, vector<16x4xf32> -> vector<16x4xf32>
    %c0_69 = arith.constant 0 : index
    %c0_70 = arith.constant 0 : index
    %235 = vector.load %arg10[%c0_69, %c0_70] : memref<1x4xf32, #tpu.memory_space<vmem>>, vector<1x4xf32>
    %236 = vector.broadcast %235 : vector<1x4xf32> to vector<16x4xf32>
    %237 = arith.addf %234, %236 : vector<16x4xf32>
    %c0_71 = arith.constant 0 : index
    %c0_72 = arith.constant 0 : index
    %238 = vector.load %arg11[%c0_71, %c0_72] : memref<16x4xf32, #tpu.memory_space<vmem>>, vector<16x4xf32>
    tpu.vector_store %arg11[%c0_71, %c0_72], %237 {strides = array<i32>} : memref<16x4xf32, #tpu.memory_space<vmem>>, vector<16x4xf32>,
    return
  }
}

</mosaic_0001>

<llo_original>
// kernel: gtc_forward.1
$region0: #{gtc_forward.1}
  #allocation0 [shape = 'u32[]', space=smem, size = 0x4, offset = 0x4, fixed_abs, tag = 'smem constant byte address 0x4 - core index']
  #allocation1 [shape = 'u32[144,128]{1,0:T(1,128)}', space=vmem, size = 0x12000, scoped, tag = 'internal scratch']
  %s0 = inlined_call_operand.hbm [shape: f32[16,16], index: 0, kind: input, shape index: {}]
  %s1 = inlined_call_operand.hbm [shape: f32[16,16], index: 1, kind: input, shape index: {}]
  %s2 = inlined_call_operand.hbm [shape: f32[16,16], index: 2, kind: input, shape index: {}]
  %s3 = inlined_call_operand.hbm [shape: f32[16,128], index: 3, kind: input, shape index: {}]
  %s4 = inlined_call_operand.vmem [shape: f32[1,128], index: 4, kind: input, shape index: {}]
  %s5 = inlined_call_operand.hbm [shape: f32[3,32], index: 5, kind: input, shape index: {}]
  %s6 = inlined_call_operand.vmem [shape: f32[32,32], index: 6, kind: input, shape index: {}]
  %s7 = inlined_call_operand.vmem [shape: f32[1,32], index: 7, kind: input, shape index: {}]
  %s8 = inlined_call_operand.vmem [shape: f32[3,8], index: 8, kind: input, shape index: {}]
  %s9 = inlined_call_operand.vmem [shape: f32[8,4], index: 9, kind: input, shape index: {}]
  %s10 = inlined_call_operand.vmem [shape: f32[1,4], index: 10, kind: input, shape index: {}]
  %s11 = inlined_call_operand.vmem [shape: f32[16,4], index: 11, kind: output, shape index: {}]
  %s12 = sld [smem:[#allocation0]]
  $region74: #{gtc_forward.1} parent=0
    _
  %s14 = ssub.s32 1, %s12
  %s15 = scalar_select 0, %s14, %s12
  $region1: #{gtc_forward.1} parent=0
    #allocation2 [shape = 'u8[8192]{0}', space=vmem, size = 0x2000, scoped, tag = 'input window, operand 0, single buffered']
    #allocation3 [shape = 's32[1]{0}', space=sflag, size = 0x4, scoped, tag = 'scoped memory for gtc_forward.1']
    #allocation4 [shape = 'u8[8192]{0}', space=vmem, size = 0x2000, scoped, tag = 'input window, operand 1, single buffered']
    #allocation5 [shape = 's32[1]{0}', space=sflag, size = 0x4, scoped, tag = 'scoped memory for gtc_forward.1']
    #allocation6 [shape = 'u8[8192]{0}', space=vmem, size = 0x2000, scoped, tag = 'input window, operand 2, single buffered']
    #allocation7 [shape = 'u8[8192]{0}', space=vmem, size = 0x2000, scoped, tag = 'input window, operand 3, single buffered']
    #allocation8 [shape = 's32[1]{0}', space=sflag, size = 0x4, scoped, tag = 'scoped memory for gtc_forward.1']
    #allocation9 [shape = 'u8[2048]{0}', space=vmem, size = 0x800, scoped, tag = 'input window, operand 5, single buffered']
    %16 = vsyncpa [#allocation3], 0
    %17 = vsyncpa [#allocation5], 0
    %18 = vsyncpa [#allocation8], 0
    // Predicated region
    $region2: #{gtc_forward.1} parent=1 // pred_check
      _
    $region3: #{gtc_forward.1} parent=1 // pred_check_branch
      %20 = sbr.rel (0) target = $region5
    $region4: #{gtc_forward.1} parent=1 // pred_region
      %s22 = ssub.s32 256, 256
      %23 = vsyncadd [#allocation3], %s22
      %s24 = sshll.u32 [#allocation2], 4
      %s25 = int_to_ptr.vmem [resolvable:$true] %s24
      %30 = dma.hbm_to_vmem [thread:$0]  %s0, 256, %s25, [#allocation3], 128, 128, 8
    $region5: #{gtc_forward.1} parent=1 // pred_fallthru
      _
    // Predicated region
    $region6: #{gtc_forward.1} parent=1 // pred_check
      _
    $region7: #{gtc_forward.1} parent=1 // pred_check_branch
      %32 = sbr.rel (0) target = $region9
    $region8: #{gtc_forward.1} parent=1 // pred_region
      %s34 = ssub.s32 256, 256
      %35 = vsyncadd [#allocation5], %s34
      %s36 = sshll.u32 [#allocation4], 4
      %s37 = int_to_ptr.vmem [resolvable:$true] %s36
      %42 = dma.hbm_to_vmem [thread:$0]  %s1, 256, %s37, [#allocation5], 128, 128, 8
    $region9: #{gtc_forward.1} parent=1 // pred_fallthru
      _
    // Predicated region
    $region10: #{gtc_forward.1} parent=1 // pred_check
      _
    $region11: #{gtc_forward.1} parent=1 // pred_check_branch
      %44 = sbr.rel (0) target = $region13
    $region12: #{gtc_forward.1} parent=1 // pred_region
      %s46 = ssub.s32 256, 256
      %47 = vsyncadd [#allocation5], %s46
      %s48 = sshll.u32 [#allocation6], 4
      %s49 = int_to_ptr.vmem [resolvable:$true] %s48
      %54 = dma.hbm_to_vmem [thread:$0]  %s2, 256, %s49, [#allocation5], 128, 128, 8
    $region13: #{gtc_forward.1} parent=1 // pred_fallthru
      _
    // Predicated region
    $region14: #{gtc_forward.1} parent=1 // pred_check
      _
    $region15: #{gtc_forward.1} parent=1 // pred_check_branch
      %56 = sbr.rel (0) target = $region17
    $region16: #{gtc_forward.1} parent=1 // pred_region
      %s58 = ssub.s32 256, 256
      %59 = vsyncadd [#allocation8], %s58
      %s60 = sshll.u32 [#allocation7], 4
      %s61 = int_to_ptr.vmem [resolvable:$true] %s60
      %66 = dma.hbm_to_vmem [thread:$0]  %s3, 256, %s61, [#allocation8], 128, 128, 8
    $region17: #{gtc_forward.1} parent=1 // pred_fallthru
      _
    // Predicated region
    $region18: #{gtc_forward.1} parent=1 // pred_check
      _
    $region19: #{gtc_forward.1} parent=1 // pred_check_branch
      %68 = sbr.rel (0) target = $region21
    $region20: #{gtc_forward.1} parent=1 // pred_region
      _
    $region21: #{gtc_forward.1} parent=1 // pred_fallthru
      _
    // Predicated region
    $region22: #{gtc_forward.1} parent=1 // pred_check
      _
    $region23: #{gtc_forward.1} parent=1 // pred_check_branch
      %70 = sbr.rel (0) target = $region25
    $region24: #{gtc_forward.1} parent=1 // pred_region
      %s72 = ssub.s32 64, 64
      %73 = vsyncadd [#allocation8], %s72
      %s75 = sshll.u32 [#allocation9], 4
      %s76 = int_to_ptr.vmem [resolvable:$true] %s75
      %78 = dma.hbm_to_vmem [thread:$0]  %s5, 64, %s76, [#allocation8]
    $region25: #{gtc_forward.1} parent=1 // pred_fallthru
      _
    // Predicated region
    $region26: #{gtc_forward.1} parent=1 // pred_check
      _
    $region27: #{gtc_forward.1} parent=1 // pred_check_branch
      %80 = sbr.rel (0) target = $region29
    $region28: #{gtc_forward.1} parent=1 // pred_region
      _
    $region29: #{gtc_forward.1} parent=1 // pred_fallthru
      _
    // Predicated region
    $region30: #{gtc_forward.1} parent=1 // pred_check
      _
    $region31: #{gtc_forward.1} parent=1 // pred_check_branch
      %82 = sbr.rel (0) target = $region33
    $region32: #{gtc_forward.1} parent=1 // pred_region
      _
    $region33: #{gtc_forward.1} parent=1 // pred_fallthru
      _
    // Predicated region
    $region34: #{gtc_forward.1} parent=1 // pred_check
      _
    $region35: #{gtc_forward.1} parent=1 // pred_check_branch
      %84 = sbr.rel (0) target = $region37
    $region36: #{gtc_forward.1} parent=1 // pred_region
      _
    $region37: #{gtc_forward.1} parent=1 // pred_fallthru
      _
    // Predicated region
    $region38: #{gtc_forward.1} parent=1 // pred_check
      _
    $region39: #{gtc_forward.1} parent=1 // pred_check_branch
      %86 = sbr.rel (0) target = $region41
    $region40: #{gtc_forward.1} parent=1 // pred_region
      _
    $region41: #{gtc_forward.1} parent=1 // pred_fallthru
      _
    // Predicated region
    $region42: #{gtc_forward.1} parent=1 // pred_check
      _
    $region43: #{gtc_forward.1} parent=1 // pred_check_branch
      %88 = sbr.rel (0) target = $region45
    $region44: #{gtc_forward.1} parent=1 // pred_region
      _
    $region45: #{gtc_forward.1} parent=1 // pred_fallthru
      _
    // Predicated region
    $region46: #{gtc_forward.1} parent=1 // pred_check
      _
    $region47: #{gtc_forward.1} parent=1 // pred_check_branch
      %90 = sbr.rel (0) target = $region49
    $region48: #{gtc_forward.1} parent=1 // pred_region
      %91 = dma.done [#allocation3], 256
    $region49: #{gtc_forward.1} parent=1 // pred_fallthru
      _
    // Predicated region
    $region50: #{gtc_forward.1} parent=1 // pred_check
      _
    $region51: #{gtc_forward.1} parent=1 // pred_check_branch
      %93 = sbr.rel (0) target = $region53
    $region52: #{gtc_forward.1} parent=1 // pred_region
      %94 = dma.done [#allocation5], 256
    $region53: #{gtc_forward.1} parent=1 // pred_fallthru
      _
    // Predicated region
    $region54: #{gtc_forward.1} parent=1 // pred_check
      _
    $region55: #{gtc_forward.1} parent=1 // pred_check_branch
      %96 = sbr.rel (0) target = $region57
    $region56: #{gtc_forward.1} parent=1 // pred_region
      %97 = dma.done [#allocation5], 256
    $region57: #{gtc_forward.1} parent=1 // pred_fallthru
      _
    // Predicated region
    $region58: #{gtc_forward.1} parent=1 // pred_check
      _
    $region59: #{gtc_forward.1} parent=1 // pred_check_branch
      %99 = sbr.rel (0) target = $region61
    $region60: #{gtc_forward.1} parent=1 // pred_region
      %100 = dma.done [#allocation8], 256
    $region61: #{gtc_forward.1} parent=1 // pred_fallthru
      _
    // Predicated region
    $region62: #{gtc_forward.1} parent=1 // pred_check
      _
    $region63: #{gtc_forward.1} parent=1 // pred_check_branch
      %102 = sbr.rel (0) target = $region65
    $region64: #{gtc_forward.1} parent=1 // pred_region
      %103 = dma.done [#allocation8], 64
    $region65: #{gtc_forward.1} parent=1 // pred_fallthru
      _
    %v104 = vld [vmem:[#allocation2] sm:$0xff]
    %v105 = vld [vmem:[#allocation2 + $0x8] sm:$0xff]
    %v106 = vld [vmem:[#allocation4] sm:$0xff]
    %v107 = vld [vmem:[#allocation4 + $0x8] sm:$0xff]
    %v108 = vld [vmem:[#allocation6] sm:$0xff]
    %v109 = vld [vmem:[#allocation6 + $0x8] sm:$0xff]
    %v110 = vld [vmem:[#allocation7] sm:$0xff]
    %v111 = vld [vmem:[#allocation7 + $0x8] sm:$0xff]
    %v112 = vld [vmem:[%s4] sm:$0x1]
    %v113 = vld [vmem:[#allocation9] sm:$0x7]
    %v115 = vlaneseq
    %v116 = vshrl.u32 %v115, 7
    %v117 = vsub.s32 0, %v116
    %v118 = vrot.slane %v112, %v117
    %vm120 = vcmask 130048
    %v122 = vsel %vm120, %v104, 0
    %v125 = vsel %vm120, %v105, 0
    %127 = vmatprep.subr.mxu0 0.0
    %128 = vmatpush1.msra.mxu0 %v110
    %129 = vmatprep.subr.mxu0 0.0
    %130 = vmatpush1.msra.mxu0 %v111
    %131 = vmatprep.subr.mxu0 0.0
    %132 = vmatpush1.msra.mxu0 0.0
    %133 = vmatprep.subr.mxu0 0.0
    %134 = vmatpush1.msra.mxu0 0.0
    %135 = vmatprep.subr.mxu0 0.0
    %136 = vmatpush1.msra.mxu0 0.0
    %137 = vmatprep.subr.mxu0 0.0
    %138 = vmatpush1.msra.mxu0 0.0
    %139 = vmatprep.subr.mxu0 0.0
    %140 = vmatpush1.msra.mxu0 0.0
    %141 = vmatprep.subr.mxu0 0.0
    %142 = vmatpush1.msra.mxu0 0.0
    %143 = vmatprep.subr.mxu0 0.0
    %144 = vmatpush1.msra.mxu0 0.0
    %145 = vmatprep.subr.mxu0 0.0
    %146 = vmatpush1.msra.mxu0 0.0
    %147 = vmatprep.subr.mxu0 0.0
    %148 = vmatpush1.msra.mxu0 0.0
    %149 = vmatprep.subr.mxu0 0.0
    %150 = vmatpush1.msra.mxu0 0.0
    %151 = vmatprep.subr.mxu0 0.0
    %152 = vmatpush1.msra.mxu0 0.0
    %153 = vmatprep.subr.mxu0 0.0
    %154 = vmatpush1.msra.mxu0 0.0
    %155 = vmatprep.subr.mxu0 0.0
    %156 = vmatpush1.msra.mxu0 0.0
    %157 = vmatprep.subr.mxu0 0.0
    %158 = vmatpush1.msra.mxu0 0.0
    %159 = vmatprep.subr.mxu0 0.0
    %160 = vmatpush1.msra.mxu0 0.0
    %161 = vmatprep.subr.mxu0 0.0
    %162 = vmatpush1.msra.mxu0 0.0
    %163 = vmatprep.subr.mxu0 0.0
    %164 = vmatpush1.msra.mxu0 0.0
    %165 = vmatprep.subr.mxu0 0.0
    %166 = vmatpush1.msra.mxu0 0.0
    %167 = vmatprep.subr.mxu0 0.0
    %168 = vmatpush1.msra.mxu0 0.0
    %169 = vmatprep.subr.mxu0 0.0
    %170 = vmatpush1.msra.mxu0 0.0
    %171 = vmatprep.subr.mxu0 0.0
    %172 = vmatpush1.msra.mxu0 0.0
    %173 = vmatprep.subr.mxu0 0.0
    %174 = vmatpush1.msra.mxu0 0.0
    %175 = vmatprep.subr.mxu0 0.0
    %176 = vmatpush1.msra.mxu0 0.0
    %177 = vmatprep.subr.mxu0 0.0
    %178 = vmatpush1.msra.mxu0 0.0
    %179 = vmatprep.subr.mxu0 0.0
    %180 = vmatpush1.msra.mxu0 0.0
    %181 = vmatprep.subr.mxu0 0.0
    %182 = vmatpush1.msra.mxu0 0.0
    %183 = vmatprep.subr.mxu0 0.0
    %184 = vmatpush1.msra.mxu0 0.0
    %185 = vmatprep.subr.mxu0 0.0
    %186 = vmatpush1.msra.mxu0 0.0
    %187 = vmatprep.subr.mxu0 0.0
    %188 = vmatpush1.msra.mxu0 0.0
    %189 = vmatprep.subr.mxu0 0.0
    %190 = vmatpush1.msra.mxu0 0.0
    %191 = vmatprep.mubr.f32.mxu0 0.0
    %192 = vmatmul.mubr.f32.gmra.mrb[0].mxu0 %v122
    %v193 = vpop.f32.mrb[0].mxu0
    %v194 = vadd.f32 %v118, %v193
    %v195 = vpop.f32.mrb[0].mxu0
    %196 = vmatprep.mubr.f32.mxu0 0.0
    %197 = vmatmul.mubr.f32.gmra.mrb[0].mxu0 %v125
    %v198 = vpop.f32.mrb[0].mxu0
    %v199 = vadd.f32 %v118, %v198
    %v200 = vpop.f32.mrb[0].mxu0
    %201 = vdwg.mxu0
    %vm202 = vcmp.gt.f32.partialorder %v106, 0.0
    %vm203 = vcmp.gt.f32.partialorder %v107, 0.0
    %v204 = vlaneseq
    %v205 = vshrl.u32 %v204, 7
    %v206 = vsub.s32 0, %v205
    %v207 = vrot.slane %v113, %v206
    %v208 = vmul.f32 %v194, %v207
    %v209 = vmul.f32 %v199, %v207
    %vm210 = vcmask 64512
    %v211 = vsel %vm210, %v208, 0.0
    %212 = vadd.xlane.f32.xlu0 %v211
    %v213 = vpop.xlane.xlu0 %212
    %v214 = vsel %vm210, %v209, 0.0
    %215 = vadd.xlane.f32.xlu0 %v214
    %v216 = vpop.xlane.xlu0 %215
    %v217 = vmul.f32 %v213, %v108
    %v218 = vmul.f32 %v216, %v109
    %221 = vrot.lane.b32.xlu0 %v194, 96
    %v222 = vpop.permute.xlu0 %221
    %223 = vrot.lane.b32.xlu0 %v199, 96
    %v224 = vpop.permute.xlu0 %223
    %v225 = vsel %vm210, %v194, 0
    %v227 = vsel %vm210, %v199, 0
    %v229 = vsel %vm210, %v222, 0
    %v231 = vsel %vm210, %v224, 0
    %233 = vmatprep.subr.mxu0 0.0
    %234 = vmatpush1.xpose.msra.mxu0 %v229
    %235 = vmatprep.subr.mxu0 0.0
    %236 = vmatpush1.xpose.msra.mxu0 %v231
    %237 = vmatprep.subr.mxu0 0.0
    %238 = vmatpush1.xpose.msra.mxu0 0.0
    %239 = vmatprep.subr.mxu0 0.0
    %240 = vmatpush1.xpose.msra.mxu0 0.0
    %241 = vmatprep.subr.mxu0 0.0
    %242 = vmatpush1.xpose.msra.mxu0 0.0
    %243 = vmatprep.subr.mxu0 0.0
    %244 = vmatpush1.xpose.msra.mxu0 0.0
    %245 = vmatprep.subr.mxu0 0.0
    %246 = vmatpush1.xpose.msra.mxu0 0.0
    %247 = vmatprep.subr.mxu0 0.0
    %248 = vmatpush1.xpose.msra.mxu0 0.0
    %249 = vmatprep.subr.mxu0 0.0
    %250 = vmatpush1.xpose.msra.mxu0 0.0
    %251 = vmatprep.subr.mxu0 0.0
    %252 = vmatpush1.xpose.msra.mxu0 0.0
    %253 = vmatprep.subr.mxu0 0.0
    %254 = vmatpush1.xpose.msra.mxu0 0.0
    %255 = vmatprep.subr.mxu0 0.0
    %256 = vmatpush1.xpose.msra.mxu0 0.0
    %257 = vmatprep.subr.mxu0 0.0
    %258 = vmatpush1.xpose.msra.mxu0 0.0
    %259 = vmatprep.subr.mxu0 0.0
    %260 = vmatpush1.xpose.msra.mxu0 0.0
    %261 = vmatprep.subr.mxu0 0.0
    %262 = vmatpush1.xpose.msra.mxu0 0.0
    %263 = vmatprep.subr.mxu0 0.0
    %264 = vmatpush1.xpose.msra.mxu0 0.0
    %265 = vmatprep.subr.mxu0 0.0
    %266 = vmatpush1.xpose.msra.mxu0 0.0
    %267 = vmatprep.subr.mxu0 0.0
    %268 = vmatpush1.xpose.msra.mxu0 0.0
    %269 = vmatprep.subr.mxu0 0.0
    %270 = vmatpush1.xpose.msra.mxu0 0.0
    %271 = vmatprep.subr.mxu0 0.0
    %272 = vmatpush1.xpose.msra.mxu0 0.0
    %273 = vmatprep.subr.mxu0 0.0
    %274 = vmatpush1.xpose.msra.mxu0 0.0
    %275 = vmatprep.subr.mxu0 0.0
    %276 = vmatpush1.xpose.msra.mxu0 0.0
    %277 = vmatprep.subr.mxu0 0.0
    %278 = vmatpush1.xpose.msra.mxu0 0.0
    %279 = vmatprep.subr.mxu0 0.0
    %280 = vmatpush1.xpose.msra.mxu0 0.0
    %281 = vmatprep.subr.mxu0 0.0
    %282 = vmatpush1.xpose.msra.mxu0 0.0
    %283 = vmatprep.subr.mxu0 0.0
    %284 = vmatpush1.xpose.msra.mxu0 0.0
    %285 = vmatprep.subr.mxu0 0.0
    %286 = vmatpush1.xpose.msra.mxu0 0.0
    %287 = vmatprep.subr.mxu0 0.0
    %288 = vmatpush1.xpose.msra.mxu0 0.0
    %289 = vmatprep.subr.mxu0 0.0
    %290 = vmatpush1.xpose.msra.mxu0 0.0
    %291 = vmatprep.subr.mxu0 0.0
    %292 = vmatpush1.xpose.msra.mxu0 0.0
    %293 = vmatprep.subr.mxu0 0.0
    %294 = vmatpush1.xpose.msra.mxu0 0.0
    %295 = vmatprep.subr.mxu0 0.0
    %296 = vmatpush1.xpose.msra.mxu0 0.0
    %297 = vmatprep.mubr.f32.mxu0 0.0
    %298 = vmatmul.mubr.f32.gmra.mrb[0].mxu0 %v225
    %v299 = vpop.f32.mrb[0].mxu0
    %v300 = vadd.f32 %v217, %v299
    %v301 = vpop.f32.mrb[0].mxu0
    %302 = vmatprep.mubr.f32.mxu0 0.0
    %303 = vmatmul.mubr.f32.gmra.mrb[0].mxu0 %v227
    %v304 = vpop.f32.mrb[0].mxu0
    %v305 = vadd.f32 %v218, %v304
    %v306 = vpop.f32.mrb[0].mxu0
    %307 = vdwg.mxu0
    %v308 = vmul.f32 %v300, 0.35355338
    %v309 = vmul.f32 %v305, 0.35355338
    %v310 = vsel %vm202, %v308, -1e+30
    %v311 = vsel %vm203, %v309, -1e+30
    %v312 = vsel %vm120, %v310, -inf
    %313 = vmax.xlane.f32.xlu0 %v312
    %v314 = vpop.xlane.xlu0 %313
    %v315 = vsel %vm120, %v311, -inf
    %316 = vmax.xlane.f32.xlu0 %v315
    %v317 = vpop.xlane.xlu0 %316
    %v318 = vsub.f32 %v310, %v314
    %v319 = vsub.f32 %v311, %v317
    %v320 = vmul.f32 %v318, 1.442695
    %v321 = vpow.pop %v320
    %v322 = vmul.f32 %v319, 1.442695
    %v323 = vpow.pop %v322
    %v324 = vmul.f32 %v321, %v106
    %v325 = vmul.f32 %v323, %v107
    %v326 = vsel %vm120, %v324, 0.0
    %327 = vadd.xlane.f32.xlu0 %v326
    %v328 = vpop.xlane.xlu0 %327
    %v329 = vsel %vm120, %v325, 0.0
    %330 = vadd.xlane.f32.xlu0 %v329
    %v331 = vpop.xlane.xlu0 %330
    %v332 = vmax.f32 %v328, 1e-30
    %v333 = vmax.f32 %v331, 1e-30
    %v334 = vrcp.pop %v332
    %v335 = vmul.f32 %v324, %v334
    %v336 = vrcp.pop %v333
    %v337 = vmul.f32 %v325, %v336
    %v338 = vmul.f32 %v335, %v108
    %v339 = vmul.f32 %v337, %v109
    %v340 = vsel %vm120, %v338, 0.0
    %341 = vadd.xlane.f32.xlu0 %v340
    %v342 = vpop.xlane.xlu0 %341
    %v343 = vsel %vm120, %v339, 0.0
    %344 = vadd.xlane.f32.xlu0 %v343
    %v345 = vpop.xlane.xlu0 %344
    %v346 = vmul.f32 %v342, %v207
    %v347 = vmul.f32 %v345, %v207
    %348 = vrot.lane.b32.xlu0 %v194, 64
    %v349 = vpop.permute.xlu0 %348
    %350 = vrot.lane.b32.xlu0 %v199, 64
    %v351 = vpop.permute.xlu0 %350
    %v355 = vsel %vm120, %v335, 0
    %v358 = vsel %vm120, %v337, 0
    %360 = vmatprep.subr.mxu0 0.0
    %361 = vmatpush1.msra.mxu0 %v349
    %362 = vmatprep.subr.mxu0 0.0
    %363 = vmatpush1.msra.mxu0 %v351
    %364 = vmatprep.subr.mxu0 0.0
    %365 = vmatpush1.msra.mxu0 0.0
    %366 = vmatprep.subr.mxu0 0.0
    %367 = vmatpush1.msra.mxu0 0.0
    %368 = vmatprep.subr.mxu0 0.0
    %369 = vmatpush1.msra.mxu0 0.0
    %370 = vmatprep.subr.mxu0 0.0
    %371 = vmatpush1.msra.mxu0 0.0
    %372 = vmatprep.subr.mxu0 0.0
    %373 = vmatpush1.msra.mxu0 0.0
    %374 = vmatprep.subr.mxu0 0.0
    %375 = vmatpush1.msra.mxu0 0.0
    %376 = vmatprep.subr.mxu0 0.0
    %377 = vmatpush1.msra.mxu0 0.0
    %378 = vmatprep.subr.mxu0 0.0
    %379 = vmatpush1.msra.mxu0 0.0
    %380 = vmatprep.subr.mxu0 0.0
    %381 = vmatpush1.msra.mxu0 0.0
    %382 = vmatprep.subr.mxu0 0.0
    %383 = vmatpush1.msra.mxu0 0.0
    %384 = vmatprep.subr.mxu0 0.0
    %385 = vmatpush1.msra.mxu0 0.0
    %386 = vmatprep.subr.mxu0 0.0
    %387 = vmatpush1.msra.mxu0 0.0
    %388 = vmatprep.subr.mxu0 0.0
    %389 = vmatpush1.msra.mxu0 0.0
    %390 = vmatprep.subr.mxu0 0.0
    %391 = vmatpush1.msra.mxu0 0.0
    %392 = vmatprep.subr.mxu0 0.0
    %393 = vmatpush1.msra.mxu0 0.0
    %394 = vmatprep.subr.mxu0 0.0
    %395 = vmatpush1.msra.mxu0 0.0
    %396 = vmatprep.subr.mxu0 0.0
    %397 = vmatpush1.msra.mxu0 0.0
    %398 = vmatprep.subr.mxu0 0.0
    %399 = vmatpush1.msra.mxu0 0.0
    %400 = vmatprep.subr.mxu0 0.0
    %401 = vmatpush1.msra.mxu0 0.0
    %402 = vmatprep.subr.mxu0 0.0
    %403 = vmatpush1.msra.mxu0 0.0
    %404 = vmatprep.subr.mxu0 0.0
    %405 = vmatpush1.msra.mxu0 0.0
    %406 = vmatprep.subr.mxu0 0.0
    %407 = vmatpush1.msra.mxu0 0.0
    %408 = vmatprep.subr.mxu0 0.0
    %409 = vmatpush1.msra.mxu0 0.0
    %410 = vmatprep.subr.mxu0 0.0
    %411 = vmatpush1.msra.mxu0 0.0
    %412 = vmatprep.subr.mxu0 0.0
    %413 = vmatpush1.msra.mxu0 0.0
    %414 = vmatprep.subr.mxu0 0.0
    %415 = vmatpush1.msra.mxu0 0.0
    %416 = vmatprep.subr.mxu0 0.0
    %417 = vmatpush1.msra.mxu0 0.0
    %418 = vmatprep.subr.mxu0 0.0
    %419 = vmatpush1.msra.mxu0 0.0
    %420 = vmatprep.subr.mxu0 0.0
    %421 = vmatpush1.msra.mxu0 0.0
    %422 = vmatprep.subr.mxu0 0.0
    %423 = vmatpush1.msra.mxu0 0.0
    %424 = vmatprep.mubr.f32.mxu0 0.0
    %425 = vmatmul.mubr.f32.gmra.mrb[0].mxu0 %v355
    %v426 = vpop.f32.mrb[0].mxu0
    %v427 = vadd.f32 %v346, %v426
    %v428 = vpop.f32.mrb[0].mxu0
    %429 = vmatprep.mubr.f32.mxu0 0.0
    %430 = vmatmul.mubr.f32.gmra.mrb[0].mxu0 %v358
    %v431 = vpop.f32.mrb[0].mxu0
    %v432 = vadd.f32 %v347, %v431
    %v433 = vpop.f32.mrb[0].mxu0
    %434 = vdwg.mxu0
    %437 = vrot.lane.b32.xlu0 %v208, 120
    %v438 = vpop.permute.xlu0 %437
    %439 = vrot.lane.b32.xlu0 %v209, 120
    %v440 = vpop.permute.xlu0 %439
    %v443 = vsel %vm210, %v438, 0.0
    %444 = vadd.xlane.f32.xlu0 %v443
    %v445 = vpop.xlane.xlu0 %444
    %v446 = vsel %vm210, %v440, 0.0
    %447 = vadd.xlane.f32.xlu0 %v446
    %v448 = vpop.xlane.xlu0 %447
    %v449 = vmul.f32 %v445, %v108
    %v450 = vmul.f32 %v448, %v109
    %451 = vrot.lane.b32.xlu0 %v194, 120
    %v452 = vpop.permute.xlu0 %451
    %453 = vrot.lane.b32.xlu0 %v199, 120
    %v454 = vpop.permute.xlu0 %453
    %455 = vrot.lane.b32.xlu0 %v194, 88
    %v456 = vpop.permute.xlu0 %455
    %457 = vrot.lane.b32.xlu0 %v199, 88
    %v458 = vpop.permute.xlu0 %457
    %v459 = vsel %vm210, %v452, 0
    %v461 = vsel %vm210, %v454, 0
    %v463 = vsel %vm210, %v456, 0
    %v465 = vsel %vm210, %v458, 0
    %467 = vmatprep.subr.mxu0 0.0
    %468 = vmatpush1.xpose.msra.mxu0 %v463
    %469 = vmatprep.subr.mxu0 0.0
    %470 = vmatpush1.xpose.msra.mxu0 %v465
    %471 = vmatprep.subr.mxu0 0.0
    %472 = vmatpush1.xpose.msra.mxu0 0.0
    %473 = vmatprep.subr.mxu0 0.0
    %474 = vmatpush1.xpose.msra.mxu0 0.0
    %475 = vmatprep.subr.mxu0 0.0
    %476 = vmatpush1.xpose.msra.mxu0 0.0
    %477 = vmatprep.subr.mxu0 0.0
    %478 = vmatpush1.xpose.msra.mxu0 0.0
    %479 = vmatprep.subr.mxu0 0.0
    %480 = vmatpush1.xpose.msra.mxu0 0.0
    %481 = vmatprep.subr.mxu0 0.0
    %482 = vmatpush1.xpose.msra.mxu0 0.0
    %483 = vmatprep.subr.mxu0 0.0
    %484 = vmatpush1.xpose.msra.mxu0 0.0
    %485 = vmatprep.subr.mxu0 0.0
    %486 = vmatpush1.xpose.msra.mxu0 0.0
    %487 = vmatprep.subr.mxu0 0.0
    %488 = vmatpush1.xpose.msra.mxu0 0.0
    %489 = vmatprep.subr.mxu0 0.0
    %490 = vmatpush1.xpose.msra.mxu0 0.0
    %491 = vmatprep.subr.mxu0 0.0
    %492 = vmatpush1.xpose.msra.mxu0 0.0
    %493 = vmatprep.subr.mxu0 0.0
    %494 = vmatpush1.xpose.msra.mxu0 0.0
    %495 = vmatprep.subr.mxu0 0.0
    %496 = vmatpush1.xpose.msra.mxu0 0.0
    %497 = vmatprep.subr.mxu0 0.0
    %498 = vmatpush1.xpose.msra.mxu0 0.0
    %499 = vmatprep.subr.mxu0 0.0
    %500 = vmatpush1.xpose.msra.mxu0 0.0
    %501 = vmatprep.subr.mxu0 0.0
    %502 = vmatpush1.xpose.msra.mxu0 0.0
    %503 = vmatprep.subr.mxu0 0.0
    %504 = vmatpush1.xpose.msra.mxu0 0.0
    %505 = vmatprep.subr.mxu0 0.0
    %506 = vmatpush1.xpose.msra.mxu0 0.0
    %507 = vmatprep.subr.mxu0 0.0
    %508 = vmatpush1.xpose.msra.mxu0 0.0
    %509 = vmatprep.subr.mxu0 0.0
    %510 = vmatpush1.xpose.msra.mxu0 0.0
    %511 = vmatprep.subr.mxu0 0.0
    %512 = vmatpush1.xpose.msra.mxu0 0.0
    %513 = vmatprep.subr.mxu0 0.0
    %514 = vmatpush1.xpose.msra.mxu0 0.0
    %515 = vmatprep.subr.mxu0 0.0
    %516 = vmatpush1.xpose.msra.mxu0 0.0
    %517 = vmatprep.subr.mxu0 0.0
    %518 = vmatpush1.xpose.msra.mxu0 0.0
    %519 = vmatprep.subr.mxu0 0.0
    %520 = vmatpush1.xpose.msra.mxu0 0.0
    %521 = vmatprep.subr.mxu0 0.0
    %522 = vmatpush1.xpose.msra.mxu0 0.0
    %523 = vmatprep.subr.mxu0 0.0
    %524 = vmatpush1.xpose.msra.mxu0 0.0
    %525 = vmatprep.subr.mxu0 0.0
    %526 = vmatpush1.xpose.msra.mxu0 0.0
    %527 = vmatprep.subr.mxu0 0.0
    %528 = vmatpush1.xpose.msra.mxu0 0.0
    %529 = vmatprep.subr.mxu0 0.0
    %530 = vmatpush1.xpose.msra.mxu0 0.0
    %531 = vmatprep.mubr.f32.mxu0 0.0
    %532 = vmatmul.mubr.f32.gmra.mrb[0].mxu0 %v459
    %v533 = vpop.f32.mrb[0].mxu0
    %v534 = vadd.f32 %v449, %v533
    %v535 = vpop.f32.mrb[0].mxu0
    %536 = vmatprep.mubr.f32.mxu0 0.0
    %537 = vmatmul.mubr.f32.gmra.mrb[0].mxu0 %v461
    %v538 = vpop.f32.mrb[0].mxu0
    %v539 = vadd.f32 %v450, %v538
    %v540 = vpop.f32.mrb[0].mxu0
    %541 = vdwg.mxu0
    %v542 = vmul.f32 %v534, 0.35355338
    %v543 = vmul.f32 %v539, 0.35355338
    %v544 = vsel %vm202, %v542, -1e+30
    %v545 = vsel %vm203, %v543, -1e+30
    %v546 = vsel %vm120, %v544, -inf
    %547 = vmax.xlane.f32.xlu0 %v546
    %v548 = vpop.xlane.xlu0 %547
    %v549 = vsel %vm120, %v545, -inf
    %550 = vmax.xlane.f32.xlu0 %v549
    %v551 = vpop.xlane.xlu0 %550
    %v552 = vsub.f32 %v544, %v548
    %v553 = vsub.f32 %v545, %v551
    %v554 = vmul.f32 %v552, 1.442695
    %v555 = vpow.pop %v554
    %v556 = vmul.f32 %v553, 1.442695
    %v557 = vpow.pop %v556
    %v558 = vmul.f32 %v555, %v106
    %v559 = vmul.f32 %v557, %v107
    %v560 = vsel %vm120, %v558, 0.0
    %561 = vadd.xlane.f32.xlu0 %v560
    %v562 = vpop.xlane.xlu0 %561
    %v563 = vsel %vm120, %v559, 0.0
    %564 = vadd.xlane.f32.xlu0 %v563
    %v565 = vpop.xlane.xlu0 %564
    %v566 = vmax.f32 %v562, 1e-30
    %v567 = vmax.f32 %v565, 1e-30
    %v568 = vrcp.pop %v566
    %v569 = vmul.f32 %v558, %v568
    %v570 = vrcp.pop %v567
    %v571 = vmul.f32 %v559, %v570
    %v572 = vmul.f32 %v569, %v108
    %v573 = vmul.f32 %v571, %v109
    %v574 = vsel %vm120, %v572, 0.0
    %575 = vadd.xlane.f32.xlu0 %v574
    %v576 = vpop.xlane.xlu0 %575
    %v577 = vsel %vm120, %v573, 0.0
    %578 = vadd.xlane.f32.xlu0 %v577
    %v579 = vpop.xlane.xlu0 %578
    %v580 = vmul.f32 %v576, %v207
    %v581 = vmul.f32 %v579, %v207
    %582 = vrot.lane.b32.xlu0 %v194, 56
    %v583 = vpop.permute.xlu0 %582
    %584 = vrot.lane.b32.xlu0 %v199, 56
    %v585 = vpop.permute.xlu0 %584
    %590 = vrot.lane.b32.xlu0 %v580, 120
    %v591 = vpop.permute.xlu0 %590
    %592 = vrot.lane.b32.xlu0 %v581, 120
    %v593 = vpop.permute.xlu0 %592
    %v597 = vsel %vm120, %v569, 0
    %v600 = vsel %vm120, %v571, 0
    %602 = vmatprep.subr.mxu0 0.0
    %603 = vmatpush1.msra.mxu0 %v583
    %604 = vmatprep.subr.mxu0 0.0
    %605 = vmatpush1.msra.mxu0 %v585
    %606 = vmatprep.subr.mxu0 0.0
    %607 = vmatpush1.msra.mxu0 0.0
    %608 = vmatprep.subr.mxu0 0.0
    %609 = vmatpush1.msra.mxu0 0.0
    %610 = vmatprep.subr.mxu0 0.0
    %611 = vmatpush1.msra.mxu0 0.0
    %612 = vmatprep.subr.mxu0 0.0
    %613 = vmatpush1.msra.mxu0 0.0
    %614 = vmatprep.subr.mxu0 0.0
    %615 = vmatpush1.msra.mxu0 0.0
    %616 = vmatprep.subr.mxu0 0.0
    %617 = vmatpush1.msra.mxu0 0.0
    %618 = vmatprep.subr.mxu0 0.0
    %619 = vmatpush1.msra.mxu0 0.0
    %620 = vmatprep.subr.mxu0 0.0
    %621 = vmatpush1.msra.mxu0 0.0
    %622 = vmatprep.subr.mxu0 0.0
    %623 = vmatpush1.msra.mxu0 0.0
    %624 = vmatprep.subr.mxu0 0.0
    %625 = vmatpush1.msra.mxu0 0.0
    %626 = vmatprep.subr.mxu0 0.0
    %627 = vmatpush1.msra.mxu0 0.0
    %628 = vmatprep.subr.mxu0 0.0
    %629 = vmatpush1.msra.mxu0 0.0
    %630 = vmatprep.subr.mxu0 0.0
    %631 = vmatpush1.msra.mxu0 0.0
    %632 = vmatprep.subr.mxu0 0.0
    %633 = vmatpush1.msra.mxu0 0.0
    %634 = vmatprep.subr.mxu0 0.0
    %635 = vmatpush1.msra.mxu0 0.0
    %636 = vmatprep.subr.mxu0 0.0
    %637 = vmatpush1.msra.mxu0 0.0
    %638 = vmatprep.subr.mxu0 0.0
    %639 = vmatpush1.msra.mxu0 0.0
    %640 = vmatprep.subr.mxu0 0.0
    %641 = vmatpush1.msra.mxu0 0.0
    %642 = vmatprep.subr.mxu0 0.0
    %643 = vmatpush1.msra.mxu0 0.0
    %644 = vmatprep.subr.mxu0 0.0
    %645 = vmatpush1.msra.mxu0 0.0
    %646 = vmatprep.subr.mxu0 0.0
    %647 = vmatpush1.msra.mxu0 0.0
    %648 = vmatprep.subr.mxu0 0.0
    %649 = vmatpush1.msra.mxu0 0.0
    %650 = vmatprep.subr.mxu0 0.0
    %651 = vmatpush1.msra.mxu0 0.0
    %652 = vmatprep.subr.mxu0 0.0
    %653 = vmatpush1.msra.mxu0 0.0
    %654 = vmatprep.subr.mxu0 0.0
    %655 = vmatpush1.msra.mxu0 0.0
    %656 = vmatprep.subr.mxu0 0.0
    %657 = vmatpush1.msra.mxu0 0.0
    %658 = vmatprep.subr.mxu0 0.0
    %659 = vmatpush1.msra.mxu0 0.0
    %660 = vmatprep.subr.mxu0 0.0
    %661 = vmatpush1.msra.mxu0 0.0
    %662 = vmatprep.subr.mxu0 0.0
    %663 = vmatpush1.msra.mxu0 0.0
    %664 = vmatprep.subr.mxu0 0.0
    %665 = vmatpush1.msra.mxu0 0.0
    %666 = vmatprep.mubr.f32.mxu0 0.0
    %667 = vmatmul.mubr.f32.gmra.mrb[0].mxu0 %v597
    %v668 = vpop.f32.mrb[0].mxu0
    %v669 = vadd.f32 %v591, %v668
    %v670 = vpop.f32.mrb[0].mxu0
    %671 = vmatprep.mubr.f32.mxu0 0.0
    %672 = vmatmul.mubr.f32.gmra.mrb[0].mxu0 %v600
    %v673 = vpop.f32.mrb[0].mxu0
    %v674 = vadd.f32 %v593, %v673
    %v675 = vpop.f32.mrb[0].mxu0
    %676 = vdwg.mxu0
    %677 = vrot.lane.b32.xlu0 %v208, 112
    %v678 = vpop.permute.xlu0 %677
    %679 = vrot.lane.b32.xlu0 %v209, 112
    %v680 = vpop.permute.xlu0 %679
    %v683 = vsel %vm210, %v678, 0.0
    %684 = vadd.xlane.f32.xlu0 %v683
    %v685 = vpop.xlane.xlu0 %684
    %v686 = vsel %vm210, %v680, 0.0
    %687 = vadd.xlane.f32.xlu0 %v686
    %v688 = vpop.xlane.xlu0 %687
    %v689 = vmul.f32 %v685, %v108
    %v690 = vmul.f32 %v688, %v109
    %691 = vrot.lane.b32.xlu0 %v194, 112
    %v692 = vpop.permute.xlu0 %691
    %693 = vrot.lane.b32.xlu0 %v199, 112
    %v694 = vpop.permute.xlu0 %693
    %695 = vrot.lane.b32.xlu0 %v194, 80
    %v696 = vpop.permute.xlu0 %695
    %697 = vrot.lane.b32.xlu0 %v199, 80
    %v698 = vpop.permute.xlu0 %697
    %v699 = vsel %vm210, %v692, 0
    %v701 = vsel %vm210, %v694, 0
    %v703 = vsel %vm210, %v696, 0
    %v705 = vsel %vm210, %v698, 0
    %707 = vmatprep.subr.mxu0 0.0
    %708 = vmatpush1.xpose.msra.mxu0 %v703
    %709 = vmatprep.subr.mxu0 0.0
    %710 = vmatpush1.xpose.msra.mxu0 %v705
    %711 = vmatprep.subr.mxu0 0.0
    %712 = vmatpush1.xpose.msra.mxu0 0.0
    %713 = vmatprep.subr.mxu0 0.0
    %714 = vmatpush1.xpose.msra.mxu0 0.0
    %715 = vmatprep.subr.mxu0 0.0
    %716 = vmatpush1.xpose.msra.mxu0 0.0
    %717 = vmatprep.subr.mxu0 0.0
    %718 = vmatpush1.xpose.msra.mxu0 0.0
    %719 = vmatprep.subr.mxu0 0.0
    %720 = vmatpush1.xpose.msra.mxu0 0.0
    %721 = vmatprep.subr.mxu0 0.0
    %722 = vmatpush1.xpose.msra.mxu0 0.0
    %723 = vmatprep.subr.mxu0 0.0
    %724 = vmatpush1.xpose.msra.mxu0 0.0
    %725 = vmatprep.subr.mxu0 0.0
    %726 = vmatpush1.xpose.msra.mxu0 0.0
    %727 = vmatprep.subr.mxu0 0.0
    %728 = vmatpush1.xpose.msra.mxu0 0.0
    %729 = vmatprep.subr.mxu0 0.0
    %730 = vmatpush1.xpose.msra.mxu0 0.0
    %731 = vmatprep.subr.mxu0 0.0
    %732 = vmatpush1.xpose.msra.mxu0 0.0
    %733 = vmatprep.subr.mxu0 0.0
    %734 = vmatpush1.xpose.msra.mxu0 0.0
    %735 = vmatprep.subr.mxu0 0.0
    %736 = vmatpush1.xpose.msra.mxu0 0.0
    %737 = vmatprep.subr.mxu0 0.0
    %738 = vmatpush1.xpose.msra.mxu0 0.0
    %739 = vmatprep.subr.mxu0 0.0
    %740 = vmatpush1.xpose.msra.mxu0 0.0
    %741 = vmatprep.subr.mxu0 0.0
    %742 = vmatpush1.xpose.msra.mxu0 0.0
    %743 = vmatprep.subr.mxu0 0.0
    %744 = vmatpush1.xpose.msra.mxu0 0.0
    %745 = vmatprep.subr.mxu0 0.0
    %746 = vmatpush1.xpose.msra.mxu0 0.0
    %747 = vmatprep.subr.mxu0 0.0
    %748 = vmatpush1.xpose.msra.mxu0 0.0
    %749 = vmatprep.subr.mxu0 0.0
    %750 = vmatpush1.xpose.msra.mxu0 0.0
    %751 = vmatprep.subr.mxu0 0.0
    %752 = vmatpush1.xpose.msra.mxu0 0.0
    %753 = vmatprep.subr.mxu0 0.0
    %754 = vmatpush1.xpose.msra.mxu0 0.0
    %755 = vmatprep.subr.mxu0 0.0
    %756 = vmatpush1.xpose.msra.mxu0 0.0
    %757 = vmatprep.subr.mxu0 0.0
    %758 = vmatpush1.xpose.msra.mxu0 0.0
    %759 = vmatprep.subr.mxu0 0.0
    %760 = vmatpush1.xpose.msra.mxu0 0.0
    %761 = vmatprep.subr.mxu0 0.0
    %762 = vmatpush1.xpose.msra.mxu0 0.0
    %763 = vmatprep.subr.mxu0 0.0
    %764 = vmatpush1.xpose.msra.mxu0 0.0
    %765 = vmatprep.subr.mxu0 0.0
    %766 = vmatpush1.xpose.msra.mxu0 0.0
    %767 = vmatprep.subr.mxu0 0.0
    %768 = vmatpush1.xpose.msra.mxu0 0.0
    %769 = vmatprep.subr.mxu0 0.0
    %770 = vmatpush1.xpose.msra.mxu0 0.0
    %771 = vmatprep.mubr.f32.mxu0 0.0
    %772 = vmatmul.mubr.f32.gmra.mrb[0].mxu0 %v699
    %v773 = vpop.f32.mrb[0].mxu0
    %v774 = vadd.f32 %v689, %v773
    %v775 = vpop.f32.mrb[0].mxu0
    %776 = vmatprep.mubr.f32.mxu0 0.0
    %777 = vmatmul.mubr.f32.gmra.mrb[0].mxu0 %v701
    %v778 = vpop.f32.mrb[0].mxu0
    %v779 = vadd.f32 %v690, %v778
    %v780 = vpop.f32.mrb[0].mxu0
    %781 = vdwg.mxu0
    %v782 = vmul.f32 %v774, 0.35355338
    %v783 = vmul.f32 %v779, 0.35355338
    %v784 = vsel %vm202, %v782, -1e+30
    %v785 = vsel %vm203, %v783, -1e+30
    %v786 = vsel %vm120, %v784, -inf
    %787 = vmax.xlane.f32.xlu0 %v786
    %v788 = vpop.xlane.xlu0 %787
    %v789 = vsel %vm120, %v785, -inf
    %790 = vmax.xlane.f32.xlu0 %v789
    %v791 = vpop.xlane.xlu0 %790
    %v792 = vsub.f32 %v784, %v788
    %v793 = vsub.f32 %v785, %v791
    %v794 = vmul.f32 %v792, 1.442695
    %v795 = vpow.pop %v794
    %v796 = vmul.f32 %v793, 1.442695
    %v797 = vpow.pop %v796
    %v798 = vmul.f32 %v795, %v106
    %v799 = vmul.f32 %v797, %v107
    %v800 = vsel %vm120, %v798, 0.0
    %801 = vadd.xlane.f32.xlu0 %v800
    %v802 = vpop.xlane.xlu0 %801
    %v803 = vsel %vm120, %v799, 0.0
    %804 = vadd.xlane.f32.xlu0 %v803
    %v805 = vpop.xlane.xlu0 %804
    %v806 = vmax.f32 %v802, 1e-30
    %v807 = vmax.f32 %v805, 1e-30
    %v808 = vrcp.pop %v806
    %v809 = vmul.f32 %v798, %v808
    %v810 = vrcp.pop %v807
    %v811 = vmul.f32 %v799, %v810
    %v812 = vmul.f32 %v809, %v108
    %v813 = vmul.f32 %v811, %v109
    %v814 = vsel %vm120, %v812, 0.0
    %815 = vadd.xlane.f32.xlu0 %v814
    %v816 = vpop.xlane.xlu0 %815
    %v817 = vsel %vm120, %v813, 0.0
    %818 = vadd.xlane.f32.xlu0 %v817
    %v819 = vpop.xlane.xlu0 %818
    %v820 = vmul.f32 %v816, %v207
    %v821 = vmul.f32 %v819, %v207
    %822 = vrot.lane.b32.xlu0 %v194, 48
    %v823 = vpop.permute.xlu0 %822
    %824 = vrot.lane.b32.xlu0 %v199, 48
    %v825 = vpop.permute.xlu0 %824
    %830 = vrot.lane.b32.xlu0 %v820, 112
    %v831 = vpop.permute.xlu0 %830
    %832 = vrot.lane.b32.xlu0 %v821, 112
    %v833 = vpop.permute.xlu0 %832
    %v837 = vsel %vm120, %v809, 0
    %v840 = vsel %vm120, %v811, 0
    %842 = vmatprep.subr.mxu0 0.0
    %843 = vmatpush1.msra.mxu0 %v823
    %844 = vmatprep.subr.mxu0 0.0
    %845 = vmatpush1.msra.mxu0 %v825
    %846 = vmatprep.subr.mxu0 0.0
    %847 = vmatpush1.msra.mxu0 0.0
    %848 = vmatprep.subr.mxu0 0.0
    %849 = vmatpush1.msra.mxu0 0.0
    %850 = vmatprep.subr.mxu0 0.0
    %851 = vmatpush1.msra.mxu0 0.0
    %852 = vmatprep.subr.mxu0 0.0
    %853 = vmatpush1.msra.mxu0 0.0
    %854 = vmatprep.subr.mxu0 0.0
    %855 = vmatpush1.msra.mxu0 0.0
    %856 = vmatprep.subr.mxu0 0.0
    %857 = vmatpush1.msra.mxu0 0.0
    %858 = vmatprep.subr.mxu0 0.0
    %859 = vmatpush1.msra.mxu0 0.0
    %860 = vmatprep.subr.mxu0 0.0
    %861 = vmatpush1.msra.mxu0 0.0
    %862 = vmatprep.subr.mxu0 0.0
    %863 = vmatpush1.msra.mxu0 0.0
    %864 = vmatprep.subr.mxu0 0.0
    %865 = vmatpush1.msra.mxu0 0.0
    %866 = vmatprep.subr.mxu0 0.0
    %867 = vmatpush1.msra.mxu0 0.0
    %868 = vmatprep.subr.mxu0 0.0
    %869 = vmatpush1.msra.mxu0 0.0
    %870 = vmatprep.subr.mxu0 0.0
    %871 = vmatpush1.msra.mxu0 0.0
    %872 = vmatprep.subr.mxu0 0.0
    %873 = vmatpush1.msra.mxu0 0.0
    %874 = vmatprep.subr.mxu0 0.0
    %875 = vmatpush1.msra.mxu0 0.0
    %876 = vmatprep.subr.mxu0 0.0
    %877 = vmatpush1.msra.mxu0 0.0
    %878 = vmatprep.subr.mxu0 0.0
    %879 = vmatpush1.msra.mxu0 0.0
    %880 = vmatprep.subr.mxu0 0.0
    %881 = vmatpush1.msra.mxu0 0.0
    %882 = vmatprep.subr.mxu0 0.0
    %883 = vmatpush1.msra.mxu0 0.0
    %884 = vmatprep.subr.mxu0 0.0
    %885 = vmatpush1.msra.mxu0 0.0
    %886 = vmatprep.subr.mxu0 0.0
    %887 = vmatpush1.msra.mxu0 0.0
    %888 = vmatprep.subr.mxu0 0.0
    %889 = vmatpush1.msra.mxu0 0.0
    %890 = vmatprep.subr.mxu0 0.0
    %891 = vmatpush1.msra.mxu0 0.0
    %892 = vmatprep.subr.mxu0 0.0
    %893 = vmatpush1.msra.mxu0 0.0
    %894 = vmatprep.subr.mxu0 0.0
    %895 = vmatpush1.msra.mxu0 0.0
    %896 = vmatprep.subr.mxu0 0.0
    %897 = vmatpush1.msra.mxu0 0.0
    %898 = vmatprep.subr.mxu0 0.0
    %899 = vmatpush1.msra.mxu0 0.0
    %900 = vmatprep.subr.mxu0 0.0
    %901 = vmatpush1.msra.mxu0 0.0
    %902 = vmatprep.subr.mxu0 0.0
    %903 = vmatpush1.msra.mxu0 0.0
    %904 = vmatprep.subr.mxu0 0.0
    %905 = vmatpush1.msra.mxu0 0.0
    %906 = vmatprep.mubr.f32.mxu0 0.0
    %907 = vmatmul.mubr.f32.gmra.mrb[0].mxu0 %v837
    %v908 = vpop.f32.mrb[0].mxu0
    %v909 = vadd.f32 %v831, %v908
    %v910 = vpop.f32.mrb[0].mxu0
    %911 = vmatprep.mubr.f32.mxu0 0.0
    %912 = vmatmul.mubr.f32.gmra.mrb[0].mxu0 %v840
    %v913 = vpop.f32.mrb[0].mxu0
    %v914 = vadd.f32 %v833, %v913
    %v915 = vpop.f32.mrb[0].mxu0
    %916 = vdwg.mxu0
    %917 = vrot.lane.b32.xlu0 %v208, 104
    %v918 = vpop.permute.xlu0 %917
    %919 = vrot.lane.b32.xlu0 %v209, 104
    %v920 = vpop.permute.xlu0 %919
    %v923 = vsel %vm210, %v918, 0.0
    %924 = vadd.xlane.f32.xlu0 %v923
    %v925 = vpop.xlane.xlu0 %924
    %v926 = vsel %vm210, %v920, 0.0
    %927 = vadd.xlane.f32.xlu0 %v926
    %v928 = vpop.xlane.xlu0 %927
    %v929 = vmul.f32 %v925, %v108
    %v930 = vmul.f32 %v928, %v109
    %931 = vrot.lane.b32.xlu0 %v194, 104
    %v932 = vpop.permute.xlu0 %931
    %933 = vrot.lane.b32.xlu0 %v199, 104
    %v934 = vpop.permute.xlu0 %933
    %935 = vrot.lane.b32.xlu0 %v194, 72
    %v936 = vpop.permute.xlu0 %935
    %937 = vrot.lane.b32.xlu0 %v199, 72
    %v938 = vpop.permute.xlu0 %937
    %v939 = vsel %vm210, %v932, 0
    %v941 = vsel %vm210, %v934, 0
    %v943 = vsel %vm210, %v936, 0
    %v945 = vsel %vm210, %v938, 0
    %947 = vmatprep.subr.mxu0 0.0
    %948 = vmatpush1.xpose.msra.mxu0 %v943
    %949 = vmatprep.subr.mxu0 0.0
    %950 = vmatpush1.xpose.msra.mxu0 %v945
    %951 = vmatprep.subr.mxu0 0.0
    %952 = vmatpush1.xpose.msra.mxu0 0.0
    %953 = vmatprep.subr.mxu0 0.0
    %954 = vmatpush1.xpose.msra.mxu0 0.0
    %955 = vmatprep.subr.mxu0 0.0
    %956 = vmatpush1.xpose.msra.mxu0 0.0
    %957 = vmatprep.subr.mxu0 0.0
    %958 = vmatpush1.xpose.msra.mxu0 0.0
    %959 = vmatprep.subr.mxu0 0.0
    %960 = vmatpush1.xpose.msra.mxu0 0.0
    %961 = vmatprep.subr.mxu0 0.0
    %962 = vmatpush1.xpose.msra.mxu0 0.0
    %963 = vmatprep.subr.mxu0 0.0
    %964 = vmatpush1.xpose.msra.mxu0 0.0
    %965 = vmatprep.subr.mxu0 0.0
    %966 = vmatpush1.xpose.msra.mxu0 0.0
    %967 = vmatprep.subr.mxu0 0.0
    %968 = vmatpush1.xpose.msra.mxu0 0.0
    %969 = vmatprep.subr.mxu0 0.0
    %970 = vmatpush1.xpose.msra.mxu0 0.0
    %971 = vmatprep.subr.mxu0 0.0
    %972 = vmatpush1.xpose.msra.mxu0 0.0
    %973 = vmatprep.subr.mxu0 0.0
    %974 = vmatpush1.xpose.msra.mxu0 0.0
    %975 = vmatprep.subr.mxu0 0.0
    %976 = vmatpush1.xpose.msra.mxu0 0.0
    %977 = vmatprep.subr.mxu0 0.0
    %978 = vmatpush1.xpose.msra.mxu0 0.0
    %979 = vmatprep.subr.mxu0 0.0
    %980 = vmatpush1.xpose.msra.mxu0 0.0
    %981 = vmatprep.subr.mxu0 0.0
    %982 = vmatpush1.xpose.msra.mxu0 0.0
    %983 = vmatprep.subr.mxu0 0.0
    %984 = vmatpush1.xpose.msra.mxu0 0.0
    %985 = vmatprep.subr.mxu0 0.0
    %986 = vmatpush1.xpose.msra.mxu0 0.0
    %987 = vmatprep.subr.mxu0 0.0
    %988 = vmatpush1.xpose.msra.mxu0 0.0
    %989 = vmatprep.subr.mxu0 0.0
    %990 = vmatpush1.xpose.msra.mxu0 0.0
    %991 = vmatprep.subr.mxu0 0.0
    %992 = vmatpush1.xpose.msra.mxu0 0.0
    %993 = vmatprep.subr.mxu0 0.0
    %994 = vmatpush1.xpose.msra.mxu0 0.0
    %995 = vmatprep.subr.mxu0 0.0
    %996 = vmatpush1.xpose.msra.mxu0 0.0
    %997 = vmatprep.subr.mxu0 0.0
    %998 = vmatpush1.xpose.msra.mxu0 0.0
    %999 = vmatprep.subr.mxu0 0.0
    %1000 = vmatpush1.xpose.msra.mxu0 0.0
    %1001 = vmatprep.subr.mxu0 0.0
    %1002 = vmatpush1.xpose.msra.mxu0 0.0
    %1003 = vmatprep.subr.mxu0 0.0
    %1004 = vmatpush1.xpose.msra.mxu0 0.0
    %1005 = vmatprep.subr.mxu0 0.0
    %1006 = vmatpush1.xpose.msra.mxu0 0.0
    %1007 = vmatprep.subr.mxu0 0.0
    %1008 = vmatpush1.xpose.msra.mxu0 0.0
    %1009 = vmatprep.subr.mxu0 0.0
    %1010 = vmatpush1.xpose.msra.mxu0 0.0
    %1011 = vmatprep.mubr.f32.mxu0 0.0
    %1012 = vmatmul.mubr.f32.gmra.mrb[0].mxu0 %v939
    %v1013 = vpop.f32.mrb[0].mxu0
    %v1014 = vadd.f32 %v929, %v1013
    %v1015 = vpop.f32.mrb[0].mxu0
    %1016 = vmatprep.mubr.f32.mxu0 0.0
    %1017 = vmatmul.mubr.f32.gmra.mrb[0].mxu0 %v941
    %v1018 = vpop.f32.mrb[0].mxu0
    %v1019 = vadd.f32 %v930, %v1018
    %v1020 = vpop.f32.mrb[0].mxu0
    %1021 = vdwg.mxu0
    %v1022 = vmul.f32 %v1014, 0.35355338
    %v1023 = vmul.f32 %v1019, 0.35355338
    %v1024 = vsel %vm202, %v1022, -1e+30
    %v1025 = vsel %vm203, %v1023, -1e+30
    %v1026 = vsel %vm120, %v1024, -inf
    %1027 = vmax.xlane.f32.xlu0 %v1026
    %v1028 = vpop.xlane.xlu0 %1027
    %v1029 = vsel %vm120, %v1025, -inf
    %1030 = vmax.xlane.f32.xlu0 %v1029
    %v1031 = vpop.xlane.xlu0 %1030
    %v1032 = vsub.f32 %v1024, %v1028
    %v1033 = vsub.f32 %v1025, %v1031
    %v1034 = vmul.f32 %v1032, 1.442695
    %v1035 = vpow.pop %v1034
    %v1036 = vmul.f32 %v1033, 1.442695
    %v1037 = vpow.pop %v1036
    %v1038 = vmul.f32 %v1035, %v106
    %v1039 = vmul.f32 %v1037, %v107
    %v1040 = vsel %vm120, %v1038, 0.0
    %1041 = vadd.xlane.f32.xlu0 %v1040
    %v1042 = vpop.xlane.xlu0 %1041
    %v1043 = vsel %vm120, %v1039, 0.0
    %1044 = vadd.xlane.f32.xlu0 %v1043
    %v1045 = vpop.xlane.xlu0 %1044
    %v1046 = vmax.f32 %v1042, 1e-30
    %v1047 = vmax.f32 %v1045, 1e-30
    %v1048 = vrcp.pop %v1046
    %v1049 = vmul.f32 %v1038, %v1048
    %v1050 = vrcp.pop %v1047
    %v1051 = vmul.f32 %v1039, %v1050
    %v1052 = vmul.f32 %v1049, %v108
    %v1053 = vmul.f32 %v1051, %v109
    %v1054 = vsel %vm120, %v1052, 0.0
    %1055 = vadd.xlane.f32.xlu0 %v1054
    %v1056 = vpop.xlane.xlu0 %1055
    %v1057 = vsel %vm120, %v1053, 0.0
    %1058 = vadd.xlane.f32.xlu0 %v1057
    %v1059 = vpop.xlane.xlu0 %1058
    %v1060 = vmul.f32 %v1056, %v207
    %v1061 = vmul.f32 %v1059, %v207
    %1062 = vrot.lane.b32.xlu0 %v194, 40
    %v1063 = vpop.permute.xlu0 %1062
    %1064 = vrot.lane.b32.xlu0 %v199, 40
    %v1065 = vpop.permute.xlu0 %1064
    %1070 = vrot.lane.b32.xlu0 %v1060, 104
    %v1071 = vpop.permute.xlu0 %1070
    %1072 = vrot.lane.b32.xlu0 %v1061, 104
    %v1073 = vpop.permute.xlu0 %1072
    %v1077 = vsel %vm120, %v1049, 0
    %v1080 = vsel %vm120, %v1051, 0
    %1082 = vmatprep.subr.mxu0 0.0
    %1083 = vmatpush1.msra.mxu0 %v1063
    %1084 = vmatprep.subr.mxu0 0.0
    %1085 = vmatpush1.msra.mxu0 %v1065
    %1086 = vmatprep.subr.mxu0 0.0
    %1087 = vmatpush1.msra.mxu0 0.0
    %1088 = vmatprep.subr.mxu0 0.0
    %1089 = vmatpush1.msra.mxu0 0.0
    %1090 = vmatprep.subr.mxu0 0.0
    %1091 = vmatpush1.msra.mxu0 0.0
    %1092 = vmatprep.subr.mxu0 0.0
    %1093 = vmatpush1.msra.mxu0 0.0
    %1094 = vmatprep.subr.mxu0 0.0
    %1095 = vmatpush1.msra.mxu0 0.0
    %1096 = vmatprep.subr.mxu0 0.0
    %1097 = vmatpush1.msra.mxu0 0.0
    %1098 = vmatprep.subr.mxu0 0.0
    %1099 = vmatpush1.msra.mxu0 0.0
    %1100 = vmatprep.subr.mxu0 0.0
    %1101 = vmatpush1.msra.mxu0 0.0
    %1102 = vmatprep.subr.mxu0 0.0
    %1103 = vmatpush1.msra.mxu0 0.0
    %1104 = vmatprep.subr.mxu0 0.0
    %1105 = vmatpush1.msra.mxu0 0.0
    %1106 = vmatprep.subr.mxu0 0.0
    %1107 = vmatpush1.msra.mxu0 0.0
    %1108 = vmatprep.subr.mxu0 0.0
    %1109 = vmatpush1.msra.mxu0 0.0
    %1110 = vmatprep.subr.mxu0 0.0
    %1111 = vmatpush1.msra.mxu0 0.0
    %1112 = vmatprep.subr.mxu0 0.0
    %1113 = vmatpush1.msra.mxu0 0.0
    %1114 = vmatprep.subr.mxu0 0.0
    %1115 = vmatpush1.msra.mxu0 0.0
    %1116 = vmatprep.subr.mxu0 0.0
    %1117 = vmatpush1.msra.mxu0 0.0
    %1118 = vmatprep.subr.mxu0 0.0
    %1119 = vmatpush1.msra.mxu0 0.0
    %1120 = vmatprep.subr.mxu0 0.0
    %1121 = vmatpush1.msra.mxu0 0.0
    %1122 = vmatprep.subr.mxu0 0.0
    %1123 = vmatpush1.msra.mxu0 0.0
    %1124 = vmatprep.subr.mxu0 0.0
    %1125 = vmatpush1.msra.mxu0 0.0
    %1126 = vmatprep.subr.mxu0 0.0
    %1127 = vmatpush1.msra.mxu0 0.0
    %1128 = vmatprep.subr.mxu0 0.0
    %1129 = vmatpush1.msra.mxu0 0.0
    %1130 = vmatprep.subr.mxu0 0.0
    %1131 = vmatpush1.msra.mxu0 0.0
    %1132 = vmatprep.subr.mxu0 0.0
    %1133 = vmatpush1.msra.mxu0 0.0
    %1134 = vmatprep.subr.mxu0 0.0
    %1135 = vmatpush1.msra.mxu0 0.0
    %1136 = vmatprep.subr.mxu0 0.0
    %1137 = vmatpush1.msra.mxu0 0.0
    %1138 = vmatprep.subr.mxu0 0.0
    %1139 = vmatpush1.msra.mxu0 0.0
    %1140 = vmatprep.subr.mxu0 0.0
    %1141 = vmatpush1.msra.mxu0 0.0
    %1142 = vmatprep.subr.mxu0 0.0
    %1143 = vmatpush1.msra.mxu0 0.0
    %1144 = vmatprep.subr.mxu0 0.0
    %1145 = vmatpush1.msra.mxu0 0.0
    %1146 = vmatprep.mubr.f32.mxu0 0.0
    %1147 = vmatmul.mubr.f32.gmra.mrb[0].mxu0 %v1077
    %v1148 = vpop.f32.mrb[0].mxu0
    %v1149 = vadd.f32 %v1071, %v1148
    %v1150 = vpop.f32.mrb[0].mxu0
    %1151 = vmatprep.mubr.f32.mxu0 0.0
    %1152 = vmatmul.mubr.f32.gmra.mrb[0].mxu0 %v1080
    %v1153 = vpop.f32.mrb[0].mxu0
    %v1154 = vadd.f32 %v1073, %v1153
    %v1155 = vpop.f32.mrb[0].mxu0
    %1156 = vdwg.mxu0
    %1159 = vrot.lane.b32.xlu0 %v669, 8
    %v1160 = vpop.permute.xlu0 %1159
    %1161 = vrot.lane.b32.xlu0 %v674, 8
    %v1162 = vpop.permute.xlu0 %1161
    %1167 = vrot.lane.b32.xlu0 %v909, 16
    %v1168 = vpop.permute.xlu0 %1167
    %1169 = vrot.lane.b32.xlu0 %v914, 16
    %v1170 = vpop.permute.xlu0 %1169
    %1175 = vrot.lane.b32.xlu0 %v1149, 24
    %v1176 = vpop.permute.xlu0 %1175
    %1177 = vrot.lane.b32.xlu0 %v1154, 24
    %v1178 = vpop.permute.xlu0 %1177
    %v1181 = vsel %vm210, %v427, %v1160
    %v1182 = vsel %vm210, %v432, %v1162
    %v1183 = vsel %vm120, %v1181, %v1168
    %v1184 = vsel %vm120, %v1182, %v1170
    %vm1185 = vcmask 195584
    %v1186 = vsel %vm1185, %v1183, %v1176
    %v1187 = vsel %vm1185, %v1184, %v1178
    %1188 = vrot.lane.b32.xlu0 %v194, 32
    %v1189 = vpop.permute.xlu0 %1188
    %1190 = vrot.lane.b32.xlu0 %v199, 32
    %v1191 = vpop.permute.xlu0 %1190
    %v1194 = vadd.f32 %v1186, %v1189
    %v1195 = vadd.f32 %v1187, %v1191
    %v1196 = vmax.f32 %v1194, 0.0
    %v1197 = vmax.f32 %v1195, 0.0
    %v1198 = vlaneseq
    %v1199 = vshrl.u32 %v1198, 7
    %v1200 = vsub.s32 1, %v1199
    %v1201 = vrot.slane %v113, %v1200
    %v1202 = vmul.f32 %v1196, %v1201
    %v1203 = vmul.f32 %v1197, %v1201
    %v1204 = vlaneseq
    %v1205 = vshrl.u32 %v1204, 7
    %v1206 = vsub.s32 2, %v1205
    %v1207 = vrot.slane %v113, %v1206
    %v1208 = vadd.f32 %v1202, %v1207
    %v1209 = vadd.f32 %v1203, %v1207
    %v1210 = vld [vmem:[%s6] sm:$0xff]
    %v1211 = vld [vmem:[%s6 + $0x8] sm:$0xff]
    %v1212 = vld [vmem:[%s6 + $0x10] sm:$0xff]
    %v1213 = vld [vmem:[%s6 + $0x18] sm:$0xff]
    %v1214 = vld [vmem:[%s7] sm:$0x1]
    %v1215 = vld [vmem:[%s8] sm:$0x7]
    %v1217 = vlaneseq
    %v1218 = vshrl.u32 %v1217, 7
    %v1219 = vsub.s32 0, %v1218
    %v1220 = vrot.slane %v1214, %v1219
    %vm1222 = vcmask 261120
    %v1224 = vsel %vm1222, %v1208, 0
    %v1227 = vsel %vm1222, %v1209, 0
    %1229 = vmatprep.subr.mxu0 0.0
    %1230 = vmatpush1.msra.mxu0 %v1210
    %1231 = vmatprep.subr.mxu0 0.0
    %1232 = vmatpush1.msra.mxu0 %v1211
    %1233 = vmatprep.subr.mxu0 0.0
    %1234 = vmatpush1.msra.mxu0 %v1212
    %1235 = vmatprep.subr.mxu0 0.0
    %1236 = vmatpush1.msra.mxu0 %v1213
    %1237 = vmatprep.subr.mxu0 0.0
    %1238 = vmatpush1.msra.mxu0 0.0
    %1239 = vmatprep.subr.mxu0 0.0
    %1240 = vmatpush1.msra.mxu0 0.0
    %1241 = vmatprep.subr.mxu0 0.0
    %1242 = vmatpush1.msra.mxu0 0.0
    %1243 = vmatprep.subr.mxu0 0.0
    %1244 = vmatpush1.msra.mxu0 0.0
    %1245 = vmatprep.subr.mxu0 0.0
    %1246 = vmatpush1.msra.mxu0 0.0
    %1247 = vmatprep.subr.mxu0 0.0
    %1248 = vmatpush1.msra.mxu0 0.0
    %1249 = vmatprep.subr.mxu0 0.0
    %1250 = vmatpush1.msra.mxu0 0.0
    %1251 = vmatprep.subr.mxu0 0.0
    %1252 = vmatpush1.msra.mxu0 0.0
    %1253 = vmatprep.subr.mxu0 0.0
    %1254 = vmatpush1.msra.mxu0 0.0
    %1255 = vmatprep.subr.mxu0 0.0
    %1256 = vmatpush1.msra.mxu0 0.0
    %1257 = vmatprep.subr.mxu0 0.0
    %1258 = vmatpush1.msra.mxu0 0.0
    %1259 = vmatprep.subr.mxu0 0.0
    %1260 = vmatpush1.msra.mxu0 0.0
    %1261 = vmatprep.subr.mxu0 0.0
    %1262 = vmatpush1.msra.mxu0 0.0
    %1263 = vmatprep.subr.mxu0 0.0
    %1264 = vmatpush1.msra.mxu0 0.0
    %1265 = vmatprep.subr.mxu0 0.0
    %1266 = vmatpush1.msra.mxu0 0.0
    %1267 = vmatprep.subr.mxu0 0.0
    %1268 = vmatpush1.msra.mxu0 0.0
    %1269 = vmatprep.subr.mxu0 0.0
    %1270 = vmatpush1.msra.mxu0 0.0
    %1271 = vmatprep.subr.mxu0 0.0
    %1272 = vmatpush1.msra.mxu0 0.0
    %1273 = vmatprep.subr.mxu0 0.0
    %1274 = vmatpush1.msra.mxu0 0.0
    %1275 = vmatprep.subr.mxu0 0.0
    %1276 = vmatpush1.msra.mxu0 0.0
    %1277 = vmatprep.subr.mxu0 0.0
    %1278 = vmatpush1.msra.mxu0 0.0
    %1279 = vmatprep.subr.mxu0 0.0
    %1280 = vmatpush1.msra.mxu0 0.0
    %1281 = vmatprep.subr.mxu0 0.0
    %1282 = vmatpush1.msra.mxu0 0.0
    %1283 = vmatprep.subr.mxu0 0.0
    %1284 = vmatpush1.msra.mxu0 0.0
    %1285 = vmatprep.subr.mxu0 0.0
    %1286 = vmatpush1.msra.mxu0 0.0
    %1287 = vmatprep.subr.mxu0 0.0
    %1288 = vmatpush1.msra.mxu0 0.0
    %1289 = vmatprep.subr.mxu0 0.0
    %1290 = vmatpush1.msra.mxu0 0.0
    %1291 = vmatprep.subr.mxu0 0.0
    %1292 = vmatpush1.msra.mxu0 0.0
    %1293 = vmatprep.mubr.f32.mxu0 0.0
    %1294 = vmatmul.mubr.f32.gmra.mrb[0].mxu0 %v1224
    %v1295 = vpop.f32.mrb[0].mxu0
    %v1296 = vadd.f32 %v1220, %v1295
    %v1297 = vpop.f32.mrb[0].mxu0
    %1298 = vmatprep.mubr.f32.mxu0 0.0
    %1299 = vmatmul.mubr.f32.gmra.mrb[0].mxu0 %v1227
    %v1300 = vpop.f32.mrb[0].mxu0
    %v1301 = vadd.f32 %v1220, %v1300
    %v1302 = vpop.f32.mrb[0].mxu0
    %1303 = vdwg.mxu0
    %v1304 = vlaneseq
    %v1305 = vshrl.u32 %v1304, 7
    %v1306 = vsub.s32 0, %v1305
    %v1307 = vrot.slane %v1215, %v1306
    %v1308 = vmul.f32 %v1296, %v1307
    %v1309 = vmul.f32 %v1301, %v1307
    %v1310 = vsel %vm210, %v1308, 0.0
    %1311 = vadd.xlane.f32.xlu0 %v1310
    %v1312 = vpop.xlane.xlu0 %1311
    %v1313 = vsel %vm210, %v1309, 0.0
    %1314 = vadd.xlane.f32.xlu0 %v1313
    %v1315 = vpop.xlane.xlu0 %1314
    %v1316 = vmul.f32 %v1312, %v108
    %v1317 = vmul.f32 %v1315, %v109
    %1320 = vrot.lane.b32.xlu0 %v1296, 120
    %v1321 = vpop.permute.xlu0 %1320
    %1322 = vrot.lane.b32.xlu0 %v1301, 120
    %v1323 = vpop.permute.xlu0 %1322
    %v1324 = vsel %vm210, %v1296, 0
    %v1326 = vsel %vm210, %v1301, 0
    %v1328 = vsel %vm210, %v1321, 0
    %v1330 = vsel %vm210, %v1323, 0
    %1332 = vmatprep.subr.mxu0 0.0
    %1333 = vmatpush1.xpose.msra.mxu0 %v1328
    %1334 = vmatprep.subr.mxu0 0.0
    %1335 = vmatpush1.xpose.msra.mxu0 %v1330
    %1336 = vmatprep.subr.mxu0 0.0
    %1337 = vmatpush1.xpose.msra.mxu0 0.0
    %1338 = vmatprep.subr.mxu0 0.0
    %1339 = vmatpush1.xpose.msra.mxu0 0.0
    %1340 = vmatprep.subr.mxu0 0.0
    %1341 = vmatpush1.xpose.msra.mxu0 0.0
    %1342 = vmatprep.subr.mxu0 0.0
    %1343 = vmatpush1.xpose.msra.mxu0 0.0
    %1344 = vmatprep.subr.mxu0 0.0
    %1345 = vmatpush1.xpose.msra.mxu0 0.0
    %1346 = vmatprep.subr.mxu0 0.0
    %1347 = vmatpush1.xpose.msra.mxu0 0.0
    %1348 = vmatprep.subr.mxu0 0.0
    %1349 = vmatpush1.xpose.msra.mxu0 0.0
    %1350 = vmatprep.subr.mxu0 0.0
    %1351 = vmatpush1.xpose.msra.mxu0 0.0
    %1352 = vmatprep.subr.mxu0 0.0
    %1353 = vmatpush1.xpose.msra.mxu0 0.0
    %1354 = vmatprep.subr.mxu0 0.0
    %1355 = vmatpush1.xpose.msra.mxu0 0.0
    %1356 = vmatprep.subr.mxu0 0.0
    %1357 = vmatpush1.xpose.msra.mxu0 0.0
    %1358 = vmatprep.subr.mxu0 0.0
    %1359 = vmatpush1.xpose.msra.mxu0 0.0
    %1360 = vmatprep.subr.mxu0 0.0
    %1361 = vmatpush1.xpose.msra.mxu0 0.0
    %1362 = vmatprep.subr.mxu0 0.0
    %1363 = vmatpush1.xpose.msra.mxu0 0.0
    %1364 = vmatprep.subr.mxu0 0.0
    %1365 = vmatpush1.xpose.msra.mxu0 0.0
    %1366 = vmatprep.subr.mxu0 0.0
    %1367 = vmatpush1.xpose.msra.mxu0 0.0
    %1368 = vmatprep.subr.mxu0 0.0
    %1369 = vmatpush1.xpose.msra.mxu0 0.0
    %1370 = vmatprep.subr.mxu0 0.0
    %1371 = vmatpush1.xpose.msra.mxu0 0.0
    %1372 = vmatprep.subr.mxu0 0.0
    %1373 = vmatpush1.xpose.msra.mxu0 0.0
    %1374 = vmatprep.subr.mxu0 0.0
    %1375 = vmatpush1.xpose.msra.mxu0 0.0
    %1376 = vmatprep.subr.mxu0 0.0
    %1377 = vmatpush1.xpose.msra.mxu0 0.0
    %1378 = vmatprep.subr.mxu0 0.0
    %1379 = vmatpush1.xpose.msra.mxu0 0.0
    %1380 = vmatprep.subr.mxu0 0.0
    %1381 = vmatpush1.xpose.msra.mxu0 0.0
    %1382 = vmatprep.subr.mxu0 0.0
    %1383 = vmatpush1.xpose.msra.mxu0 0.0
    %1384 = vmatprep.subr.mxu0 0.0
    %1385 = vmatpush1.xpose.msra.mxu0 0.0
    %1386 = vmatprep.subr.mxu0 0.0
    %1387 = vmatpush1.xpose.msra.mxu0 0.0
    %1388 = vmatprep.subr.mxu0 0.0
    %1389 = vmatpush1.xpose.msra.mxu0 0.0
    %1390 = vmatprep.subr.mxu0 0.0
    %1391 = vmatpush1.xpose.msra.mxu0 0.0
    %1392 = vmatprep.subr.mxu0 0.0
    %1393 = vmatpush1.xpose.msra.mxu0 0.0
    %1394 = vmatprep.subr.mxu0 0.0
    %1395 = vmatpush1.xpose.msra.mxu0 0.0
    %1396 = vmatprep.mubr.f32.mxu0 0.0
    %1397 = vmatmul.mubr.f32.gmra.mrb[0].mxu0 %v1324
    %v1398 = vpop.f32.mrb[0].mxu0
    %v1399 = vadd.f32 %v1316, %v1398
    %v1400 = vpop.f32.mrb[0].mxu0
    %1401 = vmatprep.mubr.f32.mxu0 0.0
    %1402 = vmatmul.mubr.f32.gmra.mrb[0].mxu0 %v1326
    %v1403 = vpop.f32.mrb[0].mxu0
    %v1404 = vadd.f32 %v1317, %v1403
    %v1405 = vpop.f32.mrb[0].mxu0
    %1406 = vdwg.mxu0
    %v1407 = vmul.f32 %v1399, 0.35355338
    %v1408 = vmul.f32 %v1404, 0.35355338
    %v1409 = vsel %vm202, %v1407, -1e+30
    %v1410 = vsel %vm203, %v1408, -1e+30
    %v1411 = vsel %vm120, %v1409, -inf
    %1412 = vmax.xlane.f32.xlu0 %v1411
    %v1413 = vpop.xlane.xlu0 %1412
    %v1414 = vsel %vm120, %v1410, -inf
    %1415 = vmax.xlane.f32.xlu0 %v1414
    %v1416 = vpop.xlane.xlu0 %1415
    %v1417 = vsub.f32 %v1409, %v1413
    %v1418 = vsub.f32 %v1410, %v1416
    %v1419 = vmul.f32 %v1417, 1.442695
    %v1420 = vpow.pop %v1419
    %v1421 = vmul.f32 %v1418, 1.442695
    %v1422 = vpow.pop %v1421
    %v1423 = vmul.f32 %v1420, %v106
    %v1424 = vmul.f32 %v1422, %v107
    %v1425 = vsel %vm120, %v1423, 0.0
    %1426 = vadd.xlane.f32.xlu0 %v1425
    %v1427 = vpop.xlane.xlu0 %1426
    %v1428 = vsel %vm120, %v1424, 0.0
    %1429 = vadd.xlane.f32.xlu0 %v1428
    %v1430 = vpop.xlane.xlu0 %1429
    %v1431 = vmax.f32 %v1427, 1e-30
    %v1432 = vmax.f32 %v1430, 1e-30
    %v1433 = vrcp.pop %v1431
    %v1434 = vmul.f32 %v1423, %v1433
    %v1435 = vrcp.pop %v1432
    %v1436 = vmul.f32 %v1424, %v1435
    %v1437 = vmul.f32 %v1434, %v108
    %v1438 = vmul.f32 %v1436, %v109
    %v1439 = vsel %vm120, %v1437, 0.0
    %1440 = vadd.xlane.f32.xlu0 %v1439
    %v1441 = vpop.xlane.xlu0 %1440
    %v1442 = vsel %vm120, %v1438, 0.0
    %1443 = vadd.xlane.f32.xlu0 %v1442
    %v1444 = vpop.xlane.xlu0 %1443
    %v1445 = vmul.f32 %v1441, %v1307
    %v1446 = vmul.f32 %v1444, %v1307
    %1447 = vrot.lane.b32.xlu0 %v1296, 112
    %v1448 = vpop.permute.xlu0 %1447
    %1449 = vrot.lane.b32.xlu0 %v1301, 112
    %v1450 = vpop.permute.xlu0 %1449
    %v1454 = vsel %vm120, %v1434, 0
    %v1457 = vsel %vm120, %v1436, 0
    %1459 = vmatprep.subr.mxu0 0.0
    %1460 = vmatpush1.msra.mxu0 %v1448
    %1461 = vmatprep.subr.mxu0 0.0
    %1462 = vmatpush1.msra.mxu0 %v1450
    %1463 = vmatprep.subr.mxu0 0.0
    %1464 = vmatpush1.msra.mxu0 0.0
    %1465 = vmatprep.subr.mxu0 0.0
    %1466 = vmatpush1.msra.mxu0 0.0
    %1467 = vmatprep.subr.mxu0 0.0
    %1468 = vmatpush1.msra.mxu0 0.0
    %1469 = vmatprep.subr.mxu0 0.0
    %1470 = vmatpush1.msra.mxu0 0.0
    %1471 = vmatprep.subr.mxu0 0.0
    %1472 = vmatpush1.msra.mxu0 0.0
    %1473 = vmatprep.subr.mxu0 0.0
    %1474 = vmatpush1.msra.mxu0 0.0
    %1475 = vmatprep.subr.mxu0 0.0
    %1476 = vmatpush1.msra.mxu0 0.0
    %1477 = vmatprep.subr.mxu0 0.0
    %1478 = vmatpush1.msra.mxu0 0.0
    %1479 = vmatprep.subr.mxu0 0.0
    %1480 = vmatpush1.msra.mxu0 0.0
    %1481 = vmatprep.subr.mxu0 0.0
    %1482 = vmatpush1.msra.mxu0 0.0
    %1483 = vmatprep.subr.mxu0 0.0
    %1484 = vmatpush1.msra.mxu0 0.0
    %1485 = vmatprep.subr.mxu0 0.0
    %1486 = vmatpush1.msra.mxu0 0.0
    %1487 = vmatprep.subr.mxu0 0.0
    %1488 = vmatpush1.msra.mxu0 0.0
    %1489 = vmatprep.subr.mxu0 0.0
    %1490 = vmatpush1.msra.mxu0 0.0
    %1491 = vmatprep.subr.mxu0 0.0
    %1492 = vmatpush1.msra.mxu0 0.0
    %1493 = vmatprep.subr.mxu0 0.0
    %1494 = vmatpush1.msra.mxu0 0.0
    %1495 = vmatprep.subr.mxu0 0.0
    %1496 = vmatpush1.msra.mxu0 0.0
    %1497 = vmatprep.subr.mxu0 0.0
    %1498 = vmatpush1.msra.mxu0 0.0
    %1499 = vmatprep.subr.mxu0 0.0
    %1500 = vmatpush1.msra.mxu0 0.0
    %1501 = vmatprep.subr.mxu0 0.0
    %1502 = vmatpush1.msra.mxu0 0.0
    %1503 = vmatprep.subr.mxu0 0.0
    %1504 = vmatpush1.msra.mxu0 0.0
    %1505 = vmatprep.subr.mxu0 0.0
    %1506 = vmatpush1.msra.mxu0 0.0
    %1507 = vmatprep.subr.mxu0 0.0
    %1508 = vmatpush1.msra.mxu0 0.0
    %1509 = vmatprep.subr.mxu0 0.0
    %1510 = vmatpush1.msra.mxu0 0.0
    %1511 = vmatprep.subr.mxu0 0.0
    %1512 = vmatpush1.msra.mxu0 0.0
    %1513 = vmatprep.subr.mxu0 0.0
    %1514 = vmatpush1.msra.mxu0 0.0
    %1515 = vmatprep.subr.mxu0 0.0
    %1516 = vmatpush1.msra.mxu0 0.0
    %1517 = vmatprep.subr.mxu0 0.0
    %1518 = vmatpush1.msra.mxu0 0.0
    %1519 = vmatprep.subr.mxu0 0.0
    %1520 = vmatpush1.msra.mxu0 0.0
    %1521 = vmatprep.subr.mxu0 0.0
    %1522 = vmatpush1.msra.mxu0 0.0
    %1523 = vmatprep.mubr.f32.mxu0 0.0
    %1524 = vmatmul.mubr.f32.gmra.mrb[0].mxu0 %v1454
    %v1525 = vpop.f32.mrb[0].mxu0
    %v1526 = vadd.f32 %v1445, %v1525
    %v1527 = vpop.f32.mrb[0].mxu0
    %1528 = vmatprep.mubr.f32.mxu0 0.0
    %1529 = vmatmul.mubr.f32.gmra.mrb[0].mxu0 %v1457
    %v1530 = vpop.f32.mrb[0].mxu0
    %v1531 = vadd.f32 %v1446, %v1530
    %v1532 = vpop.f32.mrb[0].mxu0
    %1533 = vdwg.mxu0
    %1534 = vrot.lane.b32.xlu0 %v1296, 104
    %v1535 = vpop.permute.xlu0 %1534
    %1536 = vrot.lane.b32.xlu0 %v1301, 104
    %v1537 = vpop.permute.xlu0 %1536
    %v1540 = vadd.f32 %v1526, %v1535
    %v1541 = vadd.f32 %v1531, %v1537
    %v1542 = vmax.f32 %v1540, 0.0
    %v1543 = vmax.f32 %v1541, 0.0
    %v1544 = vlaneseq
    %v1545 = vshrl.u32 %v1544, 7
    %v1546 = vsub.s32 1, %v1545
    %v1547 = vrot.slane %v1215, %v1546
    %v1548 = vmul.f32 %v1542, %v1547
    %v1549 = vmul.f32 %v1543, %v1547
    %v1550 = vlaneseq
    %v1551 = vshrl.u32 %v1550, 7
    %v1552 = vsub.s32 2, %v1551
    %v1553 = vrot.slane %v1215, %v1552
    %v1554 = vadd.f32 %v1548, %v1553
    %v1555 = vadd.f32 %v1549, %v1553
    %v1556 = vld [vmem:[%s9] sm:$0xff]
    %v1557 = vld [vmem:[%s10] sm:$0x1]
    %v1559 = vlaneseq
    %v1560 = vshrl.u32 %v1559, 7
    %v1561 = vsub.s32 0, %v1560
    %v1562 = vrot.slane %v1557, %v1561
    %v1565 = vsel %vm210, %v1554, 0
    %v1568 = vsel %vm210, %v1555, 0
    %1570 = vmatprep.subr.mxu0 0.0
    %1571 = vmatpush1.msra.mxu0 %v1556
    %1572 = vmatprep.subr.mxu0 0.0
    %1573 = vmatpush1.msra.mxu0 0.0
    %1574 = vmatprep.subr.mxu0 0.0
    %1575 = vmatpush1.msra.mxu0 0.0
    %1576 = vmatprep.subr.mxu0 0.0
    %1577 = vmatpush1.msra.mxu0 0.0
    %1578 = vmatprep.subr.mxu0 0.0
    %1579 = vmatpush1.msra.mxu0 0.0
    %1580 = vmatprep.subr.mxu0 0.0
    %1581 = vmatpush1.msra.mxu0 0.0
    %1582 = vmatprep.subr.mxu0 0.0
    %1583 = vmatpush1.msra.mxu0 0.0
    %1584 = vmatprep.subr.mxu0 0.0
    %1585 = vmatpush1.msra.mxu0 0.0
    %1586 = vmatprep.subr.mxu0 0.0
    %1587 = vmatpush1.msra.mxu0 0.0
    %1588 = vmatprep.subr.mxu0 0.0
    %1589 = vmatpush1.msra.mxu0 0.0
    %1590 = vmatprep.subr.mxu0 0.0
    %1591 = vmatpush1.msra.mxu0 0.0
    %1592 = vmatprep.subr.mxu0 0.0
    %1593 = vmatpush1.msra.mxu0 0.0
    %1594 = vmatprep.subr.mxu0 0.0
    %1595 = vmatpush1.msra.mxu0 0.0
    %1596 = vmatprep.subr.mxu0 0.0
    %1597 = vmatpush1.msra.mxu0 0.0
    %1598 = vmatprep.subr.mxu0 0.0
    %1599 = vmatpush1.msra.mxu0 0.0
    %1600 = vmatprep.subr.mxu0 0.0
    %1601 = vmatpush1.msra.mxu0 0.0
    %1602 = vmatprep.subr.mxu0 0.0
    %1603 = vmatpush1.msra.mxu0 0.0
    %1604 = vmatprep.subr.mxu0 0.0
    %1605 = vmatpush1.msra.mxu0 0.0
    %1606 = vmatprep.subr.mxu0 0.0
    %1607 = vmatpush1.msra.mxu0 0.0
    %1608 = vmatprep.subr.mxu0 0.0
    %1609 = vmatpush1.msra.mxu0 0.0
    %1610 = vmatprep.subr.mxu0 0.0
    %1611 = vmatpush1.msra.mxu0 0.0
    %1612 = vmatprep.subr.mxu0 0.0
    %1613 = vmatpush1.msra.mxu0 0.0
    %1614 = vmatprep.subr.mxu0 0.0
    %1615 = vmatpush1.msra.mxu0 0.0
    %1616 = vmatprep.subr.mxu0 0.0
    %1617 = vmatpush1.msra.mxu0 0.0
    %1618 = vmatprep.subr.mxu0 0.0
    %1619 = vmatpush1.msra.mxu0 0.0
    %1620 = vmatprep.subr.mxu0 0.0
    %1621 = vmatpush1.msra.mxu0 0.0
    %1622 = vmatprep.subr.mxu0 0.0
    %1623 = vmatpush1.msra.mxu0 0.0
    %1624 = vmatprep.subr.mxu0 0.0
    %1625 = vmatpush1.msra.mxu0 0.0
    %1626 = vmatprep.subr.mxu0 0.0
    %1627 = vmatpush1.msra.mxu0 0.0
    %1628 = vmatprep.subr.mxu0 0.0
    %1629 = vmatpush1.msra.mxu0 0.0
    %1630 = vmatprep.subr.mxu0 0.0
    %1631 = vmatpush1.msra.mxu0 0.0
    %1632 = vmatprep.subr.mxu0 0.0
    %1633 = vmatpush1.msra.mxu0 0.0
    %1634 = vmatprep.mubr.f32.mxu0 0.0
    %1635 = vmatmul.mubr.f32.gmra.mrb[0].mxu0 %v1565
    %v1636 = vpop.f32.mrb[0].mxu0
    %v1637 = vadd.f32 %v1562, %v1636
    %v1638 = vpop.f32.mrb[0].mxu0
    %1639 = vmatprep.mubr.f32.mxu0 0.0
    %1640 = vmatmul.mubr.f32.gmra.mrb[0].mxu0 %v1568
    %v1641 = vpop.f32.mrb[0].mxu0
    %v1642 = vadd.f32 %v1562, %v1641
    %v1643 = vpop.f32.mrb[0].mxu0
    %1644 = vdwg.mxu0
    %vm1645 = vcmask 31744
    %1646 = vst.msk [vmem:[%s11] sm:$0xff] %vm1645, %v1637
    %1647 = vst.msk [vmem:[%s11 + $0x8] sm:$0xff] %vm1645, %v1642
    // Predicated region
    $region66: #{gtc_forward.1} parent=1 // pred_check
      _
    $region67: #{gtc_forward.1} parent=1 // pred_check_branch
      %1649 = sbr.rel (0) target = $region69
    $region68: #{gtc_forward.1} parent=1 // pred_region
      _
    $region69: #{gtc_forward.1} parent=1 // pred_fallthru
      _
    // Predicated region
    $region70: #{gtc_forward.1} parent=1 // pred_check
      _
    $region71: #{gtc_forward.1} parent=1 // pred_check_branch
      %1651 = sbr.rel (0) target = $region73
    $region72: #{gtc_forward.1} parent=1 // pred_region
      _
    $region73: #{gtc_forward.1} parent=1 // pred_fallthru
      _
    %1652 = vsyncpa [#allocation3], 1
    %1653 = vsyncpa [#allocation5], 1
    %1654 = vsyncpa [#allocation8], 1

</llo_original>
